<compile_context>
chip_gen: v6e
topology: v6e:2x2x1
jax: 0.10.0
libtpu: 0.0.40
codegen_flags: <defaults>
</compile_context>

<pallas_src>
import functools

import jax
import jax.numpy as jnp
from jax.experimental import pallas as pl
from jax.experimental.pallas import tpu as pltpu


def _round_up(x, m):
    return ((x + m - 1) // m) * m


# --------------------------------------------------------------------------
# Kernel (everything transposed: batch sits on the 128-lane axis)
# --------------------------------------------------------------------------
def icnn_kernel(zt_ref, wy_ref, wz_ref, out_ref, *, chunk):
    # zt_ref : (8, TB)   rows 0-1 = z features, rows 2-7 = zero padding (K=8 for MXU)
    # wy_ref : (104, 8)  rows [0:32]=W_z0^T [32:64]=W_y1^T [64:96]=W_y2^T [96:97]=W_yout^T
    # wz_ref : (72, 32)  rows [0:32]=relu(W_z1)^T [32:64]=relu(W_z2)^T [64:65]=relu(W_zout)^T
    # out_ref: (1, TB)
    d = jnp.float32(0.01)
    inv2d = jnp.float32(50.0)  # 1 / (2 * d), precomputed (no divide)

    def srelu(x):
        # 5-op variant: clamping at 0 makes the second select redundant.
        r = jnp.maximum(x, 0.0)
        return jnp.where(x >= d, x, r * r * inv2d)

    def dot(a, b):
        return jnp.dot(a, b, preferred_element_type=jnp.float32)

    n_chunks = out_ref.shape[1] // chunk  # static

    def body(c, carry):
        col = pl.multiple_of(c * chunk, chunk)
        zc = zt_ref[:, pl.ds(col, chunk)]                       # (8, C)

        # layer 1: W_z0^T @ z
        z1s = srelu(dot(wy_ref[0:32, :], zc))
        # layer 2: relu(W_z1)^T @ z1s + W_y1^T @ z
        z2s = srelu(dot(wz_ref[0:32, :], z1s) + dot(wy_ref[32:64, :], zc))
        # layer 3: relu(W_z2)^T @ z2s + W_y2^T @ z
        z3s = srelu(dot(wz_ref[32:64, :], z2s) + dot(wy_ref[64:96, :], zc))
        # head: relu(W_zout)^T @ z3s + W_yout^T @ z  (row 0 of the padded (8, C) result)
        zo = dot(wz_ref[64:72, :], z3s) + dot(wy_ref[96:104, :], zc)
        out_ref[:, pl.ds(col, chunk)] = srelu(zo[0:1, :])
        return carry

    jax.lax.fori_loop(0, n_chunks, body, 0, unroll=True)


# --------------------------------------------------------------------------
# Wrapper
# --------------------------------------------------------------------------
def icnn_forward(z, params, *, tile_b=2048, chunk=256):
    N, F = z.shape
    assert F == 2
    assert chunk % 128 == 0 and tile_b % chunk == 0
    f32 = jnp.float32
    w_z0, w_y1, w_y2, w_z1, w_z2, w_yout, w_zout = params

    # Loop-invariant weight prep (ReLU + transpose), packed into two padded
    # slabs so the kernel takes 3 inputs instead of 8 tiny ones. All slab
    # slices inside the kernel land on 8-sublane tile boundaries.
    wy_slab = jnp.zeros((104, 8), f32)
    wy_slab = wy_slab.at[0:32, 0:2].set(w_z0.T.astype(f32))
    wy_slab = wy_slab.at[32:64, 0:2].set(w_y1.T.astype(f32))
    wy_slab = wy_slab.at[64:96, 0:2].set(w_y2.T.astype(f32))
    wy_slab = wy_slab.at[96:97, 0:2].set(w_yout.T.astype(f32))

    wz_slab = jnp.zeros((72, 32), f32)
    wz_slab = wz_slab.at[0:32, :].set(jnp.maximum(w_z1, 0.0).T.astype(f32))
    wz_slab = wz_slab.at[32:64, :].set(jnp.maximum(w_z2, 0.0).T.astype(f32))
    wz_slab = wz_slab.at[64:65, :].set(jnp.maximum(w_zout, 0.0).T.astype(f32))

    # Batch tiling: lane-aligned chunks; for large N prefer an even number of
    # grid steps so both v7x TensorCores get balanced work.
    n_ck = _round_up(N, chunk)
    if n_ck <= tile_b:
        tb = n_ck
        n_steps = 1
    else:
        tb = tile_b
        n_steps = pl.cdiv(n_ck, tb)
        if n_steps % 2:
            n_steps += 1
    n_pad = n_steps * tb

    # Feature-major, zero-padded to 8 sublanes (MXU-friendly K) and n_pad lanes.
    # srelu(0) = 0, so padded lanes/rows are inert and sliced off below.
    # TODO(synk): a caller supplying feature-major (2, N) data would avoid this
    # transpose+pad copy entirely; it is a secondary cost (kernel is VALU-bound).
    zt = jnp.zeros((8, n_pad), f32).at[:2, :N].set(z.T.astype(f32))

    kernel = functools.partial(icnn_kernel, chunk=chunk)

    out = pl.pallas_call(
        kernel,
        out_shape=jax.ShapeDtypeStruct((1, n_pad), f32),
        grid_spec=pltpu.PrefetchScalarGridSpec(
            num_scalar_prefetch=0,
            grid=(n_steps,),
            in_specs=[
                pl.BlockSpec((8, tb), lambda i: (0, i)),     # z^T (padded to K=8)
                pl.BlockSpec((104, 8), lambda i: (0, 0)),    # bypass-weight slab
                pl.BlockSpec((72, 32), lambda i: (0, 0)),    # relu'd z-weight slab
            ],
            out_specs=pl.BlockSpec((1, tb), lambda i: (0, i)),
        ),
        compiler_params=pltpu.CompilerParams(
            dimension_semantics=("parallel",)),
    )(zt, wy_slab, wz_slab)

    # back to the PyTorch (N, 1) convention
    return out[0, :N].reshape(N, 1)


# --------------------------------------------------------------------------
# Pure-JAX reference (for verification)
# --------------------------------------------------------------------------
def icnn_reference(z, params):
    w_z0, w_y1, w_y2, w_z1, w_z2, w_yout, w_zout = params
    d = 0.01

    def srelu(x):
        return jnp.where(x >= d, x,
                         jnp.where(x <= 0.0, 0.0, x * x / (2.0 * d)))

    z0 = z
    z1s = srelu(z0 @ w_z0)
    z2s = srelu(z1s @ jnp.maximum(w_z1, 0.0) + z0 @ w_y1)
    z3s = srelu(z2s @ jnp.maximum(w_z2, 0.0) + z0 @ w_y2)
    return srelu(z3s @ jnp.maximum(w_zout, 0.0) + z0 @ w_yout)


# --------------------------------------------------------------------------
# Main
# --------------------------------------------------------------------------
if __name__ == "__main__":
    key = jax.random.PRNGKey(0)
    keys = jax.random.split(key, 8)

    def uni(k, shape):
        # matches torch.Tensor(shape).uniform_(-0.1, 0.2)
        return jax.random.uniform(k, shape, jnp.float32, minval=-0.1, maxval=0.2)

    params = (
        uni(keys[0], (2, 32)),    # w_z0
        uni(keys[1], (2, 32)),    # w_y1
        uni(keys[2], (2, 32)),    # w_y2
        uni(keys[3], (32, 32)),   # w_z1
        uni(keys[4], (32, 32)),   # w_z2
        uni(keys[5], (2, 1)),     # w_yout
        uni(keys[6], (32, 1)),    # w_zout
    )

    N = 300  # deliberately not tile-aligned: exercises the padded ragged path
    z = jax.random.normal(keys[7], (N, 2), jnp.float32)

    out = jax.block_until_ready(icnn_forward(z, params))
    ref = icnn_reference(z, params)

    assert out.shape == (N, 1)
    max_err = float(jnp.max(jnp.abs(out - ref)))
    assert jnp.allclose(out, ref, rtol=1e-5, atol=1e-5), ("max_err", max_err)

    print("KERNEL_OK")
</pallas_src>

<mosaic_0001>
module attributes {stable_mosaic.version = 11 : i64} {
  func.func @icnn_kernel(%arg0: i32, %arg1: memref<8x512xf32, #tpu.memory_space<vmem>>, %arg2: memref<104x8xf32, #tpu.memory_space<vmem>>, %arg3: memref<72x32xf32, #tpu.memory_space<vmem>>, %arg4: memref<1x512xf32, #tpu.memory_space<vmem>>) attributes {dimension_semantics = [#tpu.dimension_semantics<parallel>], iteration_bounds = array<i64: 1>, scalar_prefetch = 0 : i64, scratch_operands = 0 : i64, tpu.core_type = #tpu.core_type<tc>, window_params = [{transform_indices = @transform_0, window_bounds = array<i64: 8, 512>}, {pipeline_mode = #tpu.pipeline_mode<synchronous>, transform_indices = @transform_1, window_bounds = array<i64: 104, 8>}, {pipeline_mode = #tpu.pipeline_mode<synchronous>, transform_indices = @transform_2, window_bounds = array<i64: 72, 32>}, {transform_indices = @transform_3, window_bounds = array<i64: 1, 512>}]} {
    %cst = arith.constant 0.00999999977 : f32
    %cst_0 = arith.constant 5.000000e+01 : f32
    %c0_i32 = arith.constant 0 : i32
    %c256_i32 = arith.constant 256 : i32
    %0 = arith.muli %c0_i32, %c256_i32 : i32
    %1 = tpu.assume_multiple %0, 256 : i32
    %c0 = arith.constant 0 : index
    %2 = arith.index_cast %1 : i32 to index
    %3 = vector.load %arg1[%c0, %2] : memref<8x512xf32, #tpu.memory_space<vmem>>, vector<8x256xf32>
    %c0_1 = arith.constant 0 : index
    %c0_2 = arith.constant 0 : index
    %4 = vector.load %arg2[%c0_1, %c0_2] : memref<104x8xf32, #tpu.memory_space<vmem>>, vector<32x8xf32>
    %cst_3 = arith.constant dense<0.000000e+00> : vector<32x256xf32>
    %5 = tpu.matmul %4, %3, %cst_3 {dimension_numbers = #tpu.dot_dimension_numbers<[1], [0], [0], [1], [0, 0, 1, 1], [], []>} : vector<32x8xf32>, vector<8x256xf32>, vector<32x256xf32> -> vector<32x256xf32>
    %cst_4 = arith.constant 0.000000e+00 : f32
    %6 = vector.broadcast %cst_4 : f32 to vector<32x256xf32>
    %7 = arith.maximumf %5, %6 : vector<32x256xf32>
    %8 = vector.broadcast %cst : f32 to vector<32x256xf32>
    %9 = arith.cmpf oge, %5, %8 : vector<32x256xf32>
    %10 = arith.mulf %7, %7 : vector<32x256xf32>
    %11 = vector.broadcast %cst_0 : f32 to vector<32x256xf32>
    %12 = arith.mulf %10, %11 : vector<32x256xf32>
    %13 = arith.select %9, %5, %12 : vector<32x256xi1>, vector<32x256xf32>
    %c0_5 = arith.constant 0 : index
    %c0_6 = arith.constant 0 : index
    %14 = vector.load %arg3[%c0_5, %c0_6] : memref<72x32xf32, #tpu.memory_space<vmem>>, vector<32x32xf32>
    %cst_7 = arith.constant dense<0.000000e+00> : vector<32x256xf32>
    %15 = tpu.matmul %14, %13, %cst_7 {dimension_numbers = #tpu.dot_dimension_numbers<[1], [0], [0], [1], [0, 0, 1, 1], [], []>} : vector<32x32xf32>, vector<32x256xf32>, vector<32x256xf32> -> vector<32x256xf32>
    %c32 = arith.constant 32 : index
    %c0_8 = arith.constant 0 : index
    %16 = vector.load %arg2[%c32, %c0_8] : memref<104x8xf32, #tpu.memory_space<vmem>>, vector<32x8xf32>
    %cst_9 = arith.constant dense<0.000000e+00> : vector<32x256xf32>
    %17 = tpu.matmul %16, %3, %cst_9 {dimension_numbers = #tpu.dot_dimension_numbers<[1], [0], [0], [1], [0, 0, 1, 1], [], []>} : vector<32x8xf32>, vector<8x256xf32>, vector<32x256xf32> -> vector<32x256xf32>
    %18 = arith.addf %15, %17 : vector<32x256xf32>
    %cst_10 = arith.constant 0.000000e+00 : f32
    %19 = vector.broadcast %cst_10 : f32 to vector<32x256xf32>
    %20 = arith.maximumf %18, %19 : vector<32x256xf32>
    %21 = vector.broadcast %cst : f32 to vector<32x256xf32>
    %22 = arith.cmpf oge, %18, %21 : vector<32x256xf32>
    %23 = arith.mulf %20, %20 : vector<32x256xf32>
    %24 = vector.broadcast %cst_0 : f32 to vector<32x256xf32>
    %25 = arith.mulf %23, %24 : vector<32x256xf32>
    %26 = arith.select %22, %18, %25 : vector<32x256xi1>, vector<32x256xf32>
    %c32_11 = arith.constant 32 : index
    %c0_12 = arith.constant 0 : index
    %27 = vector.load %arg3[%c32_11, %c0_12] : memref<72x32xf32, #tpu.memory_space<vmem>>, vector<32x32xf32>
    %cst_13 = arith.constant dense<0.000000e+00> : vector<32x256xf32>
    %28 = tpu.matmul %27, %26, %cst_13 {dimension_numbers = #tpu.dot_dimension_numbers<[1], [0], [0], [1], [0, 0, 1, 1], [], []>} : vector<32x32xf32>, vector<32x256xf32>, vector<32x256xf32> -> vector<32x256xf32>
    %c64 = arith.constant 64 : index
    %c0_14 = arith.constant 0 : index
    %29 = vector.load %arg2[%c64, %c0_14] : memref<104x8xf32, #tpu.memory_space<vmem>>, vector<32x8xf32>
    %cst_15 = arith.constant dense<0.000000e+00> : vector<32x256xf32>
    %30 = tpu.matmul %29, %3, %cst_15 {dimension_numbers = #tpu.dot_dimension_numbers<[1], [0], [0], [1], [0, 0, 1, 1], [], []>} : vector<32x8xf32>, vector<8x256xf32>, vector<32x256xf32> -> vector<32x256xf32>
    %31 = arith.addf %28, %30 : vector<32x256xf32>
    %cst_16 = arith.constant 0.000000e+00 : f32
    %32 = vector.broadcast %cst_16 : f32 to vector<32x256xf32>
    %33 = arith.maximumf %31, %32 : vector<32x256xf32>
    %34 = vector.broadcast %cst : f32 to vector<32x256xf32>
    %35 = arith.cmpf oge, %31, %34 : vector<32x256xf32>
    %36 = arith.mulf %33, %33 : vector<32x256xf32>
    %37 = vector.broadcast %cst_0 : f32 to vector<32x256xf32>
    %38 = arith.mulf %36, %37 : vector<32x256xf32>
    %39 = arith.select %35, %31, %38 : vector<32x256xi1>, vector<32x256xf32>
    %c64_17 = arith.constant 64 : index
    %c0_18 = arith.constant 0 : index
    %40 = vector.load %arg3[%c64_17, %c0_18] : memref<72x32xf32, #tpu.memory_space<vmem>>, vector<8x32xf32>
    %cst_19 = arith.constant dense<0.000000e+00> : vector<8x256xf32>
    %41 = tpu.matmul %40, %39, %cst_19 {dimension_numbers = #tpu.dot_dimension_numbers<[1], [0], [0], [1], [0, 0, 1, 1], [], []>} : vector<8x32xf32>, vector<32x256xf32>, vector<8x256xf32> -> vector<8x256xf32>
    %c96 = arith.constant 96 : index
    %c0_20 = arith.constant 0 : index
    %42 = vector.load %arg2[%c96, %c0_20] : memref<104x8xf32, #tpu.memory_space<vmem>>, vector<8x8xf32>
    %cst_21 = arith.constant dense<0.000000e+00> : vector<8x256xf32>
    %43 = tpu.matmul %42, %3, %cst_21 {dimension_numbers = #tpu.dot_dimension_numbers<[1], [0], [0], [1], [0, 0, 1, 1], [], []>} : vector<8x8xf32>, vector<8x256xf32>, vector<8x256xf32> -> vector<8x256xf32>
    %44 = arith.addf %41, %43 : vector<8x256xf32>
    %45 = vector.extract_strided_slice %44 {offsets = [0, 0], sizes = [1, 256], strides = [1, 1]} : vector<8x256xf32> to vector<1x256xf32>
    %cst_22 = arith.constant 0.000000e+00 : f32
    %46 = vector.broadcast %cst_22 : f32 to vector<1x256xf32>
    %47 = arith.maximumf %45, %46 : vector<1x256xf32>
    %48 = vector.broadcast %cst : f32 to vector<1x256xf32>
    %49 = arith.cmpf oge, %45, %48 : vector<1x256xf32>
    %50 = arith.mulf %47, %47 : vector<1x256xf32>
    %51 = vector.broadcast %cst_0 : f32 to vector<1x256xf32>
    %52 = arith.mulf %50, %51 : vector<1x256xf32>
    %53 = arith.select %49, %45, %52 : vector<1x256xi1>, vector<1x256xf32>
    %c0_23 = arith.constant 0 : index
    %54 = arith.index_cast %1 : i32 to index
    %55 = vector.load %arg4[%c0_23, %54] : memref<1x512xf32, #tpu.memory_space<vmem>>, vector<1x256xf32>
    tpu.vector_store %arg4[%c0_23, %54], %53 {strides = array<i32>} : memref<1x512xf32, #tpu.memory_space<vmem>>, vector<1x256xf32>,
    %c1_i32 = arith.constant 1 : i32
    %c256_i32_24 = arith.constant 256 : i32
    %56 = arith.muli %c1_i32, %c256_i32_24 : i32
    %57 = tpu.assume_multiple %56, 256 : i32
    %c0_25 = arith.constant 0 : index
    %58 = arith.index_cast %57 : i32 to index
    %59 = vector.load %arg1[%c0_25, %58] : memref<8x512xf32, #tpu.memory_space<vmem>>, vector<8x256xf32>
    %c0_26 = arith.constant 0 : index
    %c0_27 = arith.constant 0 : index
    %60 = vector.load %arg2[%c0_26, %c0_27] : memref<104x8xf32, #tpu.memory_space<vmem>>, vector<32x8xf32>
    %cst_28 = arith.constant dense<0.000000e+00> : vector<32x256xf32>
    %61 = tpu.matmul %60, %59, %cst_28 {dimension_numbers = #tpu.dot_dimension_numbers<[1], [0], [0], [1], [0, 0, 1, 1], [], []>} : vector<32x8xf32>, vector<8x256xf32>, vector<32x256xf32> -> vector<32x256xf32>
    %cst_29 = arith.constant 0.000000e+00 : f32
    %62 = vector.broadcast %cst_29 : f32 to vector<32x256xf32>
    %63 = arith.maximumf %61, %62 : vector<32x256xf32>
    %64 = vector.broadcast %cst : f32 to vector<32x256xf32>
    %65 = arith.cmpf oge, %61, %64 : vector<32x256xf32>
    %66 = arith.mulf %63, %63 : vector<32x256xf32>
    %67 = vector.broadcast %cst_0 : f32 to vector<32x256xf32>
    %68 = arith.mulf %66, %67 : vector<32x256xf32>
    %69 = arith.select %65, %61, %68 : vector<32x256xi1>, vector<32x256xf32>
    %c0_30 = arith.constant 0 : index
    %c0_31 = arith.constant 0 : index
    %70 = vector.load %arg3[%c0_30, %c0_31] : memref<72x32xf32, #tpu.memory_space<vmem>>, vector<32x32xf32>
    %cst_32 = arith.constant dense<0.000000e+00> : vector<32x256xf32>
    %71 = tpu.matmul %70, %69, %cst_32 {dimension_numbers = #tpu.dot_dimension_numbers<[1], [0], [0], [1], [0, 0, 1, 1], [], []>} : vector<32x32xf32>, vector<32x256xf32>, vector<32x256xf32> -> vector<32x256xf32>
    %c32_33 = arith.constant 32 : index
    %c0_34 = arith.constant 0 : index
    %72 = vector.load %arg2[%c32_33, %c0_34] : memref<104x8xf32, #tpu.memory_space<vmem>>, vector<32x8xf32>
    %cst_35 = arith.constant dense<0.000000e+00> : vector<32x256xf32>
    %73 = tpu.matmul %72, %59, %cst_35 {dimension_numbers = #tpu.dot_dimension_numbers<[1], [0], [0], [1], [0, 0, 1, 1], [], []>} : vector<32x8xf32>, vector<8x256xf32>, vector<32x256xf32> -> vector<32x256xf32>
    %74 = arith.addf %71, %73 : vector<32x256xf32>
    %cst_36 = arith.constant 0.000000e+00 : f32
    %75 = vector.broadcast %cst_36 : f32 to vector<32x256xf32>
    %76 = arith.maximumf %74, %75 : vector<32x256xf32>
    %77 = vector.broadcast %cst : f32 to vector<32x256xf32>
    %78 = arith.cmpf oge, %74, %77 : vector<32x256xf32>
    %79 = arith.mulf %76, %76 : vector<32x256xf32>
    %80 = vector.broadcast %cst_0 : f32 to vector<32x256xf32>
    %81 = arith.mulf %79, %80 : vector<32x256xf32>
    %82 = arith.select %78, %74, %81 : vector<32x256xi1>, vector<32x256xf32>
    %c32_37 = arith.constant 32 : index
    %c0_38 = arith.constant 0 : index
    %83 = vector.load %arg3[%c32_37, %c0_38] : memref<72x32xf32, #tpu.memory_space<vmem>>, vector<32x32xf32>
    %cst_39 = arith.constant dense<0.000000e+00> : vector<32x256xf32>
    %84 = tpu.matmul %83, %82, %cst_39 {dimension_numbers = #tpu.dot_dimension_numbers<[1], [0], [0], [1], [0, 0, 1, 1], [], []>} : vector<32x32xf32>, vector<32x256xf32>, vector<32x256xf32> -> vector<32x256xf32>
    %c64_40 = arith.constant 64 : index
    %c0_41 = arith.constant 0 : index
    %85 = vector.load %arg2[%c64_40, %c0_41] : memref<104x8xf32, #tpu.memory_space<vmem>>, vector<32x8xf32>
    %cst_42 = arith.constant dense<0.000000e+00> : vector<32x256xf32>
    %86 = tpu.matmul %85, %59, %cst_42 {dimension_numbers = #tpu.dot_dimension_numbers<[1], [0], [0], [1], [0, 0, 1, 1], [], []>} : vector<32x8xf32>, vector<8x256xf32>, vector<32x256xf32> -> vector<32x256xf32>
    %87 = arith.addf %84, %86 : vector<32x256xf32>
    %cst_43 = arith.constant 0.000000e+00 : f32
    %88 = vector.broadcast %cst_43 : f32 to vector<32x256xf32>
    %89 = arith.maximumf %87, %88 : vector<32x256xf32>
    %90 = vector.broadcast %cst : f32 to vector<32x256xf32>
    %91 = arith.cmpf oge, %87, %90 : vector<32x256xf32>
    %92 = arith.mulf %89, %89 : vector<32x256xf32>
    %93 = vector.broadcast %cst_0 : f32 to vector<32x256xf32>
    %94 = arith.mulf %92, %93 : vector<32x256xf32>
    %95 = arith.select %91, %87, %94 : vector<32x256xi1>, vector<32x256xf32>
    %c64_44 = arith.constant 64 : index
    %c0_45 = arith.constant 0 : index
    %96 = vector.load %arg3[%c64_44, %c0_45] : memref<72x32xf32, #tpu.memory_space<vmem>>, vector<8x32xf32>
    %cst_46 = arith.constant dense<0.000000e+00> : vector<8x256xf32>
    %97 = tpu.matmul %96, %95, %cst_46 {dimension_numbers = #tpu.dot_dimension_numbers<[1], [0], [0], [1], [0, 0, 1, 1], [], []>} : vector<8x32xf32>, vector<32x256xf32>, vector<8x256xf32> -> vector<8x256xf32>
    %c96_47 = arith.constant 96 : index
    %c0_48 = arith.constant 0 : index
    %98 = vector.load %arg2[%c96_47, %c0_48] : memref<104x8xf32, #tpu.memory_space<vmem>>, vector<8x8xf32>
    %cst_49 = arith.constant dense<0.000000e+00> : vector<8x256xf32>
    %99 = tpu.matmul %98, %59, %cst_49 {dimension_numbers = #tpu.dot_dimension_numbers<[1], [0], [0], [1], [0, 0, 1, 1], [], []>} : vector<8x8xf32>, vector<8x256xf32>, vector<8x256xf32> -> vector<8x256xf32>
    %100 = arith.addf %97, %99 : vector<8x256xf32>
    %101 = vector.extract_strided_slice %100 {offsets = [0, 0], sizes = [1, 256], strides = [1, 1]} : vector<8x256xf32> to vector<1x256xf32>
    %cst_50 = arith.constant 0.000000e+00 : f32
    %102 = vector.broadcast %cst_50 : f32 to vector<1x256xf32>
    %103 = arith.maximumf %101, %102 : vector<1x256xf32>
    %104 = vector.broadcast %cst : f32 to vector<1x256xf32>
    %105 = arith.cmpf oge, %101, %104 : vector<1x256xf32>
    %106 = arith.mulf %103, %103 : vector<1x256xf32>
    %107 = vector.broadcast %cst_0 : f32 to vector<1x256xf32>
    %108 = arith.mulf %106, %107 : vector<1x256xf32>
    %109 = arith.select %105, %101, %108 : vector<1x256xi1>, vector<1x256xf32>
    %c0_51 = arith.constant 0 : index
    %110 = arith.index_cast %57 : i32 to index
    %111 = vector.load %arg4[%c0_51, %110] : memref<1x512xf32, #tpu.memory_space<vmem>>, vector<1x256xf32>
    tpu.vector_store %arg4[%c0_51, %110], %109 {strides = array<i32>} : memref<1x512xf32, #tpu.memory_space<vmem>>, vector<1x256xf32>,
    %c2_i32 = arith.constant 2 : i32
    return
  }
  func.func @transform_0(%arg0: i32) -> (i32, i32) {
    %c0_i32 = arith.constant 0 : i32
    %c0_i32_0 = arith.constant 0 : i32
    return %c0_i32, %arg0 : i32, i32
  }
  func.func @transform_1(%arg0: i32) -> (i32, i32) {
    %c0_i32 = arith.constant 0 : i32
    %c0_i32_0 = arith.constant 0 : i32
    %c0_i32_1 = arith.constant 0 : i32
    return %c0_i32, %c0_i32_0 : i32, i32
  }
  func.func @transform_2(%arg0: i32) -> (i32, i32) {
    %c0_i32 = arith.constant 0 : i32
    %c0_i32_0 = arith.constant 0 : i32
    %c0_i32_1 = arith.constant 0 : i32
    return %c0_i32, %c0_i32_0 : i32, i32
  }
  func.func @transform_3(%arg0: i32) -> (i32, i32) {
    %c0_i32 = arith.constant 0 : i32
    %c0_i32_0 = arith.constant 0 : i32
    return %c0_i32, %arg0 : i32, i32
  }
}

</mosaic_0001>

<llo_original>
// kernel: tpu_custom_call.1
$region0: #{tpu_custom_call.1}
  #allocation0 [shape = 'u32[]', space=smem, size = 0x4, offset = 0x4, fixed_abs, tag = 'smem constant byte address 0x4 - core index']
  #allocation1 [shape = 'u32[144,128]{1,0:T(1,128)}', space=vmem, size = 0x12000, scoped, tag = 'internal scratch']
  %s0 = inlined_call_operand.vmem [shape: f32[8,512], index: 0, kind: input, shape index: {}]
  %s1 = inlined_call_operand.vmem [shape: f32[104,8], index: 1, kind: input, shape index: {}]
  %s2 = inlined_call_operand.vmem [shape: f32[72,32], index: 2, kind: input, shape index: {}]
  %s3 = inlined_call_operand.hbm [shape: f32[1,512], index: 3, kind: output, shape index: {}]
  %s4 = sld [smem:[#allocation0]]
  $region22: #{tpu_custom_call.1} parent=0
    _
  %s6 = ssub.s32 1, %s4
  %s7 = scalar_select 0, %s6, %s4
  $region1: #{tpu_custom_call.1} parent=0
    #allocation2 [shape = 'u8[2048]{0}', space=vmem, size = 0x800, scoped, tag = 'output window, operand 0, single buffered']
    #allocation3 [shape = 's32[1]{0}', space=sflag, size = 0x4, scoped, tag = 'scoped memory for tpu_custom_call.1']
    %8 = vsyncpa [#allocation3], 0
    // Predicated region
    $region2: #{tpu_custom_call.1} parent=1 // pred_check
      _
    $region3: #{tpu_custom_call.1} parent=1 // pred_check_branch
      %10 = sbr.rel (0) target = $region5
    $region4: #{tpu_custom_call.1} parent=1 // pred_region
      _
    $region5: #{tpu_custom_call.1} parent=1 // pred_fallthru
      _
    // Predicated region
    $region6: #{tpu_custom_call.1} parent=1 // pred_check
      _
    $region7: #{tpu_custom_call.1} parent=1 // pred_check_branch
      %12 = sbr.rel (0) target = $region9
    $region8: #{tpu_custom_call.1} parent=1 // pred_region
      _
    $region9: #{tpu_custom_call.1} parent=1 // pred_fallthru
      _
    // Predicated region
    $region10: #{tpu_custom_call.1} parent=1 // pred_check
      _
    $region11: #{tpu_custom_call.1} parent=1 // pred_check_branch
      %14 = sbr.rel (0) target = $region13
    $region12: #{tpu_custom_call.1} parent=1 // pred_region
      _
    $region13: #{tpu_custom_call.1} parent=1 // pred_fallthru
      _
    %v15 = vld [vmem:[%s0] sm:$0xff]
    %v16 = vld [vmem:[%s0 + $0x8] sm:$0xff]
    %v17 = vld [vmem:[%s1] sm:$0xff]
    %v18 = vld [vmem:[%s1 + $0x8] sm:$0xff]
    %v19 = vld [vmem:[%s1 + $0x10] sm:$0xff]
    %v20 = vld [vmem:[%s1 + $0x18] sm:$0xff]
    %vm21 = vcmask 64512
    %v23 = vsel %vm21, %v17, 0
    %v26 = vsel %vm21, %v18, 0
    %v29 = vsel %vm21, %v19, 0
    %v32 = vsel %vm21, %v20, 0
    %34 = vmatprep.subr.mxu0 0.0
    %35 = vmatpush1.msra.mxu0 0.0
    %36 = vmatprep.subr.mxu0 0.0
    %37 = vmatpush1.msra.mxu0 0.0
    %38 = vmatprep.subr.mxu0 0.0
    %39 = vmatpush1.msra.mxu0 0.0
    %40 = vmatprep.subr.mxu0 0.0
    %41 = vmatpush1.msra.mxu0 0.0
    %42 = vmatprep.subr.mxu0 0.0
    %43 = vmatpush1.msra.mxu0 0.0
    %44 = vmatprep.subr.mxu0 0.0
    %45 = vmatpush1.msra.mxu0 0.0
    %46 = vmatprep.subr.mxu0 0.0
    %47 = vmatpush1.msra.mxu0 0.0
    %48 = vmatprep.subr.mxu0 0.0
    %49 = vmatpush1.msra.mxu0 0.0
    %50 = vmatprep.subr.mxu0 0.0
    %51 = vmatpush1.msra.mxu0 0.0
    %52 = vmatprep.subr.mxu0 0.0
    %53 = vmatpush1.msra.mxu0 0.0
    %54 = vmatprep.subr.mxu0 0.0
    %55 = vmatpush1.msra.mxu0 0.0
    %56 = vmatprep.subr.mxu0 0.0
    %57 = vmatpush1.msra.mxu0 0.0
    %58 = vmatprep.subr.mxu0 0.0
    %59 = vmatpush1.msra.mxu0 0.0
    %60 = vmatprep.subr.mxu0 0.0
    %61 = vmatpush1.msra.mxu0 0.0
    %62 = vmatprep.subr.mxu0 0.0
    %63 = vmatpush1.msra.mxu0 0.0
    %64 = vmatprep.subr.mxu0 %v16
    %65 = vmatpush1.msra.mxu0 %v15
    %66 = vmatprep.subr.mxu0 0.0
    %67 = vmatpush2.msra.mxu0 0.0
    %68 = vmatprep.subr.mxu0 0.0
    %69 = vmatpush2.msra.mxu0 0.0
    %70 = vmatprep.subr.mxu0 0.0
    %71 = vmatpush2.msra.mxu0 0.0
    %72 = vmatprep.subr.mxu0 0.0
    %73 = vmatpush2.msra.mxu0 0.0
    %74 = vmatprep.subr.mxu0 0.0
    %75 = vmatpush2.msra.mxu0 0.0
    %76 = vmatprep.subr.mxu0 0.0
    %77 = vmatpush2.msra.mxu0 0.0
    %78 = vmatprep.subr.mxu0 0.0
    %79 = vmatpush2.msra.mxu0 0.0
    %80 = vmatprep.subr.mxu0 0.0
    %81 = vmatpush2.msra.mxu0 0.0
    %82 = vmatprep.subr.mxu0 0.0
    %83 = vmatpush2.msra.mxu0 0.0
    %84 = vmatprep.subr.mxu0 0.0
    %85 = vmatpush2.msra.mxu0 0.0
    %86 = vmatprep.subr.mxu0 0.0
    %87 = vmatpush2.msra.mxu0 0.0
    %88 = vmatprep.subr.mxu0 0.0
    %89 = vmatpush2.msra.mxu0 0.0
    %90 = vmatprep.subr.mxu0 0.0
    %91 = vmatpush2.msra.mxu0 0.0
    %92 = vmatprep.subr.mxu0 0.0
    %93 = vmatpush2.msra.mxu0 0.0
    %94 = vmatprep.subr.mxu0 0.0
    %95 = vmatpush2.msra.mxu0 0.0
    %96 = vmatprep.subr.mxu0 0.0
    %97 = vmatpush2.msra.mxu0 0.0
    %98 = vmatprep.mubr.f32.mxu0 0.0
    %99 = vmatmul.mubr.f32.gmra.mxu0 %v23
    %v100 = vpop.f32.mrf.mxu0
    %v101 = vadd.f32 0.0, %v100
    %v102 = vpop.f32.mrf.mxu0
    %v103 = vadd.f32 0.0, %v102
    %104 = vmatprep.mubr.f32.mxu0 0.0
    %105 = vmatmul.mubr.f32.gmra.mxu0 %v26
    %v106 = vpop.f32.mrf.mxu0
    %v107 = vadd.f32 0.0, %v106
    %v108 = vpop.f32.mrf.mxu0
    %v109 = vadd.f32 0.0, %v108
    %110 = vmatprep.mubr.f32.mxu0 0.0
    %111 = vmatmul.mubr.f32.gmra.mxu0 %v29
    %v112 = vpop.f32.mrf.mxu0
    %v113 = vadd.f32 0.0, %v112
    %v114 = vpop.f32.mrf.mxu0
    %v115 = vadd.f32 0.0, %v114
    %116 = vmatprep.mubr.f32.mxu0 0.0
    %117 = vmatmul.mubr.f32.gmra.mxu0 %v32
    %v118 = vpop.f32.mrf.mxu0
    %v119 = vadd.f32 0.0, %v118
    %v120 = vpop.f32.mrf.mxu0
    %v121 = vadd.f32 0.0, %v120
    %122 = vdwg.mxu0
    %v123 = vmax.f32 %v101, 0.0
    %v124 = vmax.f32 %v103, 0.0
    %v125 = vmax.f32 %v107, 0.0
    %v126 = vmax.f32 %v109, 0.0
    %v127 = vmax.f32 %v113, 0.0
    %v128 = vmax.f32 %v115, 0.0
    %v129 = vmax.f32 %v119, 0.0
    %v130 = vmax.f32 %v121, 0.0
    %vm131 = vcmp.ge.f32.partialorder %v101, 0.01
    %vm132 = vcmp.ge.f32.partialorder %v103, 0.01
    %vm133 = vcmp.ge.f32.partialorder %v107, 0.01
    %vm134 = vcmp.ge.f32.partialorder %v109, 0.01
    %vm135 = vcmp.ge.f32.partialorder %v113, 0.01
    %vm136 = vcmp.ge.f32.partialorder %v115, 0.01
    %vm137 = vcmp.ge.f32.partialorder %v119, 0.01
    %vm138 = vcmp.ge.f32.partialorder %v121, 0.01
    %v139 = vmul.f32 %v123, %v123
    %v140 = vmul.f32 %v124, %v124
    %v141 = vmul.f32 %v125, %v125
    %v142 = vmul.f32 %v126, %v126
    %v143 = vmul.f32 %v127, %v127
    %v144 = vmul.f32 %v128, %v128
    %v145 = vmul.f32 %v129, %v129
    %v146 = vmul.f32 %v130, %v130
    %v147 = vmul.f32 %v139, 50.0
    %v148 = vmul.f32 %v140, 50.0
    %v149 = vmul.f32 %v141, 50.0
    %v150 = vmul.f32 %v142, 50.0
    %v151 = vmul.f32 %v143, 50.0
    %v152 = vmul.f32 %v144, 50.0
    %v153 = vmul.f32 %v145, 50.0
    %v154 = vmul.f32 %v146, 50.0
    %v155 = vsel %vm131, %v101, %v147
    %v156 = vsel %vm132, %v103, %v148
    %v157 = vsel %vm133, %v107, %v149
    %v158 = vsel %vm134, %v109, %v150
    %v159 = vsel %vm135, %v113, %v151
    %v160 = vsel %vm136, %v115, %v152
    %v161 = vsel %vm137, %v119, %v153
    %v162 = vsel %vm138, %v121, %v154
    %v163 = vld [vmem:[%s2] sm:$0xff]
    %v164 = vld [vmem:[%s2 + $0x8] sm:$0xff]
    %v165 = vld [vmem:[%s2 + $0x10] sm:$0xff]
    %v166 = vld [vmem:[%s2 + $0x18] sm:$0xff]
    %v167 = vld [vmem:[%s1 + $0x20] sm:$0xff]
    %v168 = vld [vmem:[%s1 + $0x28] sm:$0xff]
    %v169 = vld [vmem:[%s1 + $0x30] sm:$0xff]
    %v170 = vld [vmem:[%s1 + $0x38] sm:$0xff]
    %v172 = vsel %vm21, %v167, 0
    %v175 = vsel %vm21, %v168, 0
    %v178 = vsel %vm21, %v169, 0
    %v181 = vsel %vm21, %v170, 0
    %183 = vmatprep.subr.mxu0 0.0
    %184 = vmatpush1.msra.mxu0 0.0
    %185 = vmatprep.subr.mxu0 0.0
    %186 = vmatpush1.msra.mxu0 0.0
    %187 = vmatprep.subr.mxu0 0.0
    %188 = vmatpush1.msra.mxu0 0.0
    %189 = vmatprep.subr.mxu0 0.0
    %190 = vmatpush1.msra.mxu0 0.0
    %191 = vmatprep.subr.mxu0 0.0
    %192 = vmatpush1.msra.mxu0 0.0
    %193 = vmatprep.subr.mxu0 0.0
    %194 = vmatpush1.msra.mxu0 0.0
    %195 = vmatprep.subr.mxu0 0.0
    %196 = vmatpush1.msra.mxu0 0.0
    %197 = vmatprep.subr.mxu0 0.0
    %198 = vmatpush1.msra.mxu0 0.0
    %199 = vmatprep.subr.mxu0 0.0
    %200 = vmatpush1.msra.mxu0 0.0
    %201 = vmatprep.subr.mxu0 0.0
    %202 = vmatpush1.msra.mxu0 0.0
    %203 = vmatprep.subr.mxu0 0.0
    %204 = vmatpush1.msra.mxu0 0.0
    %205 = vmatprep.subr.mxu0 0.0
    %206 = vmatpush1.msra.mxu0 0.0
    %207 = vmatprep.subr.mxu0 0.0
    %208 = vmatpush1.msra.mxu0 0.0
    %209 = vmatprep.subr.mxu0 0.0
    %210 = vmatpush1.msra.mxu0 0.0
    %211 = vmatprep.subr.mxu0 0.0
    %212 = vmatpush1.msra.mxu0 0.0
    %213 = vmatprep.subr.mxu0 %v16
    %214 = vmatpush1.msra.mxu0 %v15
    %215 = vmatprep.subr.mxu0 0.0
    %216 = vmatpush2.msra.mxu0 0.0
    %217 = vmatprep.subr.mxu0 0.0
    %218 = vmatpush2.msra.mxu0 0.0
    %219 = vmatprep.subr.mxu0 0.0
    %220 = vmatpush2.msra.mxu0 0.0
    %221 = vmatprep.subr.mxu0 0.0
    %222 = vmatpush2.msra.mxu0 0.0
    %223 = vmatprep.subr.mxu0 0.0
    %224 = vmatpush2.msra.mxu0 0.0
    %225 = vmatprep.subr.mxu0 0.0
    %226 = vmatpush2.msra.mxu0 0.0
    %227 = vmatprep.subr.mxu0 0.0
    %228 = vmatpush2.msra.mxu0 0.0
    %229 = vmatprep.subr.mxu0 0.0
    %230 = vmatpush2.msra.mxu0 0.0
    %231 = vmatprep.subr.mxu0 0.0
    %232 = vmatpush2.msra.mxu0 0.0
    %233 = vmatprep.subr.mxu0 0.0
    %234 = vmatpush2.msra.mxu0 0.0
    %235 = vmatprep.subr.mxu0 0.0
    %236 = vmatpush2.msra.mxu0 0.0
    %237 = vmatprep.subr.mxu0 0.0
    %238 = vmatpush2.msra.mxu0 0.0
    %239 = vmatprep.subr.mxu0 0.0
    %240 = vmatpush2.msra.mxu0 0.0
    %241 = vmatprep.subr.mxu0 0.0
    %242 = vmatpush2.msra.mxu0 0.0
    %243 = vmatprep.subr.mxu0 0.0
    %244 = vmatpush2.msra.mxu0 0.0
    %245 = vmatprep.subr.mxu0 0.0
    %246 = vmatpush2.msra.mxu0 0.0
    %247 = vmatprep.mubr.f32.mxu0 0.0
    %248 = vmatmul.mubr.f32.gmra.mxu0 %v172
    %v249 = vpop.f32.mrf.mxu0
    %v250 = vadd.f32 0.0, %v249
    %v251 = vpop.f32.mrf.mxu0
    %v252 = vadd.f32 0.0, %v251
    %253 = vmatprep.mubr.f32.mxu0 0.0
    %254 = vmatmul.mubr.f32.gmra.mxu0 %v175
    %v255 = vpop.f32.mrf.mxu0
    %v256 = vadd.f32 0.0, %v255
    %v257 = vpop.f32.mrf.mxu0
    %v258 = vadd.f32 0.0, %v257
    %259 = vmatprep.mubr.f32.mxu0 0.0
    %260 = vmatmul.mubr.f32.gmra.mxu0 %v178
    %v261 = vpop.f32.mrf.mxu0
    %v262 = vadd.f32 0.0, %v261
    %v263 = vpop.f32.mrf.mxu0
    %v264 = vadd.f32 0.0, %v263
    %265 = vmatprep.mubr.f32.mxu0 0.0
    %266 = vmatmul.mubr.f32.gmra.mxu0 %v181
    %v267 = vpop.f32.mrf.mxu0
    %v268 = vadd.f32 0.0, %v267
    %v269 = vpop.f32.mrf.mxu0
    %v270 = vadd.f32 0.0, %v269
    %271 = vdwg.mxu0
    %vm272 = vcmask 261120
    %v274 = vsel %vm272, %v163, 0
    %v277 = vsel %vm272, %v164, 0
    %v280 = vsel %vm272, %v165, 0
    %v283 = vsel %vm272, %v166, 0
    %285 = vmatprep.subr.mxu0 0.0
    %286 = vmatpush1.msra.mxu0 0.0
    %287 = vmatprep.subr.mxu0 0.0
    %288 = vmatpush1.msra.mxu0 0.0
    %289 = vmatprep.subr.mxu0 0.0
    %290 = vmatpush1.msra.mxu0 0.0
    %291 = vmatprep.subr.mxu0 0.0
    %292 = vmatpush1.msra.mxu0 0.0
    %293 = vmatprep.subr.mxu0 0.0
    %294 = vmatpush1.msra.mxu0 0.0
    %295 = vmatprep.subr.mxu0 0.0
    %296 = vmatpush1.msra.mxu0 0.0
    %297 = vmatprep.subr.mxu0 0.0
    %298 = vmatpush1.msra.mxu0 0.0
    %299 = vmatprep.subr.mxu0 0.0
    %300 = vmatpush1.msra.mxu0 0.0
    %301 = vmatprep.subr.mxu0 0.0
    %302 = vmatpush1.msra.mxu0 0.0
    %303 = vmatprep.subr.mxu0 0.0
    %304 = vmatpush1.msra.mxu0 0.0
    %305 = vmatprep.subr.mxu0 0.0
    %306 = vmatpush1.msra.mxu0 0.0
    %307 = vmatprep.subr.mxu0 0.0
    %308 = vmatpush1.msra.mxu0 0.0
    %309 = vmatprep.subr.mxu0 %v162
    %310 = vmatpush1.msra.mxu0 %v161
    %311 = vmatprep.subr.mxu0 %v160
    %312 = vmatpush1.msra.mxu0 %v159
    %313 = vmatprep.subr.mxu0 %v158
    %314 = vmatpush1.msra.mxu0 %v157
    %315 = vmatprep.subr.mxu0 %v156
    %316 = vmatpush1.msra.mxu0 %v155
    %317 = vmatprep.subr.mxu0 0.0
    %318 = vmatpush2.msra.mxu0 0.0
    %319 = vmatprep.subr.mxu0 0.0
    %320 = vmatpush2.msra.mxu0 0.0
    %321 = vmatprep.subr.mxu0 0.0
    %322 = vmatpush2.msra.mxu0 0.0
    %323 = vmatprep.subr.mxu0 0.0
    %324 = vmatpush2.msra.mxu0 0.0
    %325 = vmatprep.subr.mxu0 0.0
    %326 = vmatpush2.msra.mxu0 0.0
    %327 = vmatprep.subr.mxu0 0.0
    %328 = vmatpush2.msra.mxu0 0.0
    %329 = vmatprep.subr.mxu0 0.0
    %330 = vmatpush2.msra.mxu0 0.0
    %331 = vmatprep.subr.mxu0 0.0
    %332 = vmatpush2.msra.mxu0 0.0
    %333 = vmatprep.subr.mxu0 0.0
    %334 = vmatpush2.msra.mxu0 0.0
    %335 = vmatprep.subr.mxu0 0.0
    %336 = vmatpush2.msra.mxu0 0.0
    %337 = vmatprep.subr.mxu0 0.0
    %338 = vmatpush2.msra.mxu0 0.0
    %339 = vmatprep.subr.mxu0 0.0
    %340 = vmatpush2.msra.mxu0 0.0
    %341 = vmatprep.subr.mxu0 0.0
    %342 = vmatpush2.msra.mxu0 0.0
    %343 = vmatprep.subr.mxu0 0.0
    %344 = vmatpush2.msra.mxu0 0.0
    %345 = vmatprep.subr.mxu0 0.0
    %346 = vmatpush2.msra.mxu0 0.0
    %347 = vmatprep.subr.mxu0 0.0
    %348 = vmatpush2.msra.mxu0 0.0
    %349 = vmatprep.mubr.f32.mxu0 0.0
    %350 = vmatmul.mubr.f32.gmra.mxu0 %v274
    %v351 = vpop.f32.mrf.mxu0
    %v352 = vadd.f32 %v250, %v351
    %v353 = vpop.f32.mrf.mxu0
    %v354 = vadd.f32 %v252, %v353
    %355 = vmatprep.mubr.f32.mxu0 0.0
    %356 = vmatmul.mubr.f32.gmra.mxu0 %v277
    %v357 = vpop.f32.mrf.mxu0
    %v358 = vadd.f32 %v256, %v357
    %v359 = vpop.f32.mrf.mxu0
    %v360 = vadd.f32 %v258, %v359
    %361 = vmatprep.mubr.f32.mxu0 0.0
    %362 = vmatmul.mubr.f32.gmra.mxu0 %v280
    %v363 = vpop.f32.mrf.mxu0
    %v364 = vadd.f32 %v262, %v363
    %v365 = vpop.f32.mrf.mxu0
    %v366 = vadd.f32 %v264, %v365
    %367 = vmatprep.mubr.f32.mxu0 0.0
    %368 = vmatmul.mubr.f32.gmra.mxu0 %v283
    %v369 = vpop.f32.mrf.mxu0
    %v370 = vadd.f32 %v268, %v369
    %v371 = vpop.f32.mrf.mxu0
    %v372 = vadd.f32 %v270, %v371
    %373 = vdwg.mxu0
    %v374 = vmax.f32 %v352, 0.0
    %v375 = vmax.f32 %v354, 0.0
    %v376 = vmax.f32 %v358, 0.0
    %v377 = vmax.f32 %v360, 0.0
    %v378 = vmax.f32 %v364, 0.0
    %v379 = vmax.f32 %v366, 0.0
    %v380 = vmax.f32 %v370, 0.0
    %v381 = vmax.f32 %v372, 0.0
    %vm382 = vcmp.ge.f32.partialorder %v352, 0.01
    %vm383 = vcmp.ge.f32.partialorder %v354, 0.01
    %vm384 = vcmp.ge.f32.partialorder %v358, 0.01
    %vm385 = vcmp.ge.f32.partialorder %v360, 0.01
    %vm386 = vcmp.ge.f32.partialorder %v364, 0.01
    %vm387 = vcmp.ge.f32.partialorder %v366, 0.01
    %vm388 = vcmp.ge.f32.partialorder %v370, 0.01
    %vm389 = vcmp.ge.f32.partialorder %v372, 0.01
    %v390 = vmul.f32 %v374, %v374
    %v391 = vmul.f32 %v375, %v375
    %v392 = vmul.f32 %v376, %v376
    %v393 = vmul.f32 %v377, %v377
    %v394 = vmul.f32 %v378, %v378
    %v395 = vmul.f32 %v379, %v379
    %v396 = vmul.f32 %v380, %v380
    %v397 = vmul.f32 %v381, %v381
    %v398 = vmul.f32 %v390, 50.0
    %v399 = vmul.f32 %v391, 50.0
    %v400 = vmul.f32 %v392, 50.0
    %v401 = vmul.f32 %v393, 50.0
    %v402 = vmul.f32 %v394, 50.0
    %v403 = vmul.f32 %v395, 50.0
    %v404 = vmul.f32 %v396, 50.0
    %v405 = vmul.f32 %v397, 50.0
    %v406 = vsel %vm382, %v352, %v398
    %v407 = vsel %vm383, %v354, %v399
    %v408 = vsel %vm384, %v358, %v400
    %v409 = vsel %vm385, %v360, %v401
    %v410 = vsel %vm386, %v364, %v402
    %v411 = vsel %vm387, %v366, %v403
    %v412 = vsel %vm388, %v370, %v404
    %v413 = vsel %vm389, %v372, %v405
    %v414 = vld [vmem:[%s2 + $0x20] sm:$0xff]
    %v415 = vld [vmem:[%s2 + $0x28] sm:$0xff]
    %v416 = vld [vmem:[%s2 + $0x30] sm:$0xff]
    %v417 = vld [vmem:[%s2 + $0x38] sm:$0xff]
    %v418 = vld [vmem:[%s1 + $0x40] sm:$0xff]
    %v419 = vld [vmem:[%s1 + $0x48] sm:$0xff]
    %v420 = vld [vmem:[%s1 + $0x50] sm:$0xff]
    %v421 = vld [vmem:[%s1 + $0x58] sm:$0xff]
    %v423 = vsel %vm21, %v418, 0
    %v426 = vsel %vm21, %v419, 0
    %v429 = vsel %vm21, %v420, 0
    %v432 = vsel %vm21, %v421, 0
    %434 = vmatprep.subr.mxu0 0.0
    %435 = vmatpush1.msra.mxu0 0.0
    %436 = vmatprep.subr.mxu0 0.0
    %437 = vmatpush1.msra.mxu0 0.0
    %438 = vmatprep.subr.mxu0 0.0
    %439 = vmatpush1.msra.mxu0 0.0
    %440 = vmatprep.subr.mxu0 0.0
    %441 = vmatpush1.msra.mxu0 0.0
    %442 = vmatprep.subr.mxu0 0.0
    %443 = vmatpush1.msra.mxu0 0.0
    %444 = vmatprep.subr.mxu0 0.0
    %445 = vmatpush1.msra.mxu0 0.0
    %446 = vmatprep.subr.mxu0 0.0
    %447 = vmatpush1.msra.mxu0 0.0
    %448 = vmatprep.subr.mxu0 0.0
    %449 = vmatpush1.msra.mxu0 0.0
    %450 = vmatprep.subr.mxu0 0.0
    %451 = vmatpush1.msra.mxu0 0.0
    %452 = vmatprep.subr.mxu0 0.0
    %453 = vmatpush1.msra.mxu0 0.0
    %454 = vmatprep.subr.mxu0 0.0
    %455 = vmatpush1.msra.mxu0 0.0
    %456 = vmatprep.subr.mxu0 0.0
    %457 = vmatpush1.msra.mxu0 0.0
    %458 = vmatprep.subr.mxu0 0.0
    %459 = vmatpush1.msra.mxu0 0.0
    %460 = vmatprep.subr.mxu0 0.0
    %461 = vmatpush1.msra.mxu0 0.0
    %462 = vmatprep.subr.mxu0 0.0
    %463 = vmatpush1.msra.mxu0 0.0
    %464 = vmatprep.subr.mxu0 %v16
    %465 = vmatpush1.msra.mxu0 %v15
    %466 = vmatprep.subr.mxu0 0.0
    %467 = vmatpush2.msra.mxu0 0.0
    %468 = vmatprep.subr.mxu0 0.0
    %469 = vmatpush2.msra.mxu0 0.0
    %470 = vmatprep.subr.mxu0 0.0
    %471 = vmatpush2.msra.mxu0 0.0
    %472 = vmatprep.subr.mxu0 0.0
    %473 = vmatpush2.msra.mxu0 0.0
    %474 = vmatprep.subr.mxu0 0.0
    %475 = vmatpush2.msra.mxu0 0.0
    %476 = vmatprep.subr.mxu0 0.0
    %477 = vmatpush2.msra.mxu0 0.0
    %478 = vmatprep.subr.mxu0 0.0
    %479 = vmatpush2.msra.mxu0 0.0
    %480 = vmatprep.subr.mxu0 0.0
    %481 = vmatpush2.msra.mxu0 0.0
    %482 = vmatprep.subr.mxu0 0.0
    %483 = vmatpush2.msra.mxu0 0.0
    %484 = vmatprep.subr.mxu0 0.0
    %485 = vmatpush2.msra.mxu0 0.0
    %486 = vmatprep.subr.mxu0 0.0
    %487 = vmatpush2.msra.mxu0 0.0
    %488 = vmatprep.subr.mxu0 0.0
    %489 = vmatpush2.msra.mxu0 0.0
    %490 = vmatprep.subr.mxu0 0.0
    %491 = vmatpush2.msra.mxu0 0.0
    %492 = vmatprep.subr.mxu0 0.0
    %493 = vmatpush2.msra.mxu0 0.0
    %494 = vmatprep.subr.mxu0 0.0
    %495 = vmatpush2.msra.mxu0 0.0
    %496 = vmatprep.subr.mxu0 0.0
    %497 = vmatpush2.msra.mxu0 0.0
    %498 = vmatprep.mubr.f32.mxu0 0.0
    %499 = vmatmul.mubr.f32.gmra.mxu0 %v423
    %v500 = vpop.f32.mrf.mxu0
    %v501 = vadd.f32 0.0, %v500
    %v502 = vpop.f32.mrf.mxu0
    %v503 = vadd.f32 0.0, %v502
    %504 = vmatprep.mubr.f32.mxu0 0.0
    %505 = vmatmul.mubr.f32.gmra.mxu0 %v426
    %v506 = vpop.f32.mrf.mxu0
    %v507 = vadd.f32 0.0, %v506
    %v508 = vpop.f32.mrf.mxu0
    %v509 = vadd.f32 0.0, %v508
    %510 = vmatprep.mubr.f32.mxu0 0.0
    %511 = vmatmul.mubr.f32.gmra.mxu0 %v429
    %v512 = vpop.f32.mrf.mxu0
    %v513 = vadd.f32 0.0, %v512
    %v514 = vpop.f32.mrf.mxu0
    %v515 = vadd.f32 0.0, %v514
    %516 = vmatprep.mubr.f32.mxu0 0.0
    %517 = vmatmul.mubr.f32.gmra.mxu0 %v432
    %v518 = vpop.f32.mrf.mxu0
    %v519 = vadd.f32 0.0, %v518
    %v520 = vpop.f32.mrf.mxu0
    %v521 = vadd.f32 0.0, %v520
    %522 = vdwg.mxu0
    %v524 = vsel %vm272, %v414, 0
    %v527 = vsel %vm272, %v415, 0
    %v530 = vsel %vm272, %v416, 0
    %v533 = vsel %vm272, %v417, 0
    %535 = vmatprep.subr.mxu0 0.0
    %536 = vmatpush1.msra.mxu0 0.0
    %537 = vmatprep.subr.mxu0 0.0
    %538 = vmatpush1.msra.mxu0 0.0
    %539 = vmatprep.subr.mxu0 0.0
    %540 = vmatpush1.msra.mxu0 0.0
    %541 = vmatprep.subr.mxu0 0.0
    %542 = vmatpush1.msra.mxu0 0.0
    %543 = vmatprep.subr.mxu0 0.0
    %544 = vmatpush1.msra.mxu0 0.0
    %545 = vmatprep.subr.mxu0 0.0
    %546 = vmatpush1.msra.mxu0 0.0
    %547 = vmatprep.subr.mxu0 0.0
    %548 = vmatpush1.msra.mxu0 0.0
    %549 = vmatprep.subr.mxu0 0.0
    %550 = vmatpush1.msra.mxu0 0.0
    %551 = vmatprep.subr.mxu0 0.0
    %552 = vmatpush1.msra.mxu0 0.0
    %553 = vmatprep.subr.mxu0 0.0
    %554 = vmatpush1.msra.mxu0 0.0
    %555 = vmatprep.subr.mxu0 0.0
    %556 = vmatpush1.msra.mxu0 0.0
    %557 = vmatprep.subr.mxu0 0.0
    %558 = vmatpush1.msra.mxu0 0.0
    %559 = vmatprep.subr.mxu0 %v413
    %560 = vmatpush1.msra.mxu0 %v412
    %561 = vmatprep.subr.mxu0 %v411
    %562 = vmatpush1.msra.mxu0 %v410
    %563 = vmatprep.subr.mxu0 %v409
    %564 = vmatpush1.msra.mxu0 %v408
    %565 = vmatprep.subr.mxu0 %v407
    %566 = vmatpush1.msra.mxu0 %v406
    %567 = vmatprep.subr.mxu0 0.0
    %568 = vmatpush2.msra.mxu0 0.0
    %569 = vmatprep.subr.mxu0 0.0
    %570 = vmatpush2.msra.mxu0 0.0
    %571 = vmatprep.subr.mxu0 0.0
    %572 = vmatpush2.msra.mxu0 0.0
    %573 = vmatprep.subr.mxu0 0.0
    %574 = vmatpush2.msra.mxu0 0.0
    %575 = vmatprep.subr.mxu0 0.0
    %576 = vmatpush2.msra.mxu0 0.0
    %577 = vmatprep.subr.mxu0 0.0
    %578 = vmatpush2.msra.mxu0 0.0
    %579 = vmatprep.subr.mxu0 0.0
    %580 = vmatpush2.msra.mxu0 0.0
    %581 = vmatprep.subr.mxu0 0.0
    %582 = vmatpush2.msra.mxu0 0.0
    %583 = vmatprep.subr.mxu0 0.0
    %584 = vmatpush2.msra.mxu0 0.0
    %585 = vmatprep.subr.mxu0 0.0
    %586 = vmatpush2.msra.mxu0 0.0
    %587 = vmatprep.subr.mxu0 0.0
    %588 = vmatpush2.msra.mxu0 0.0
    %589 = vmatprep.subr.mxu0 0.0
    %590 = vmatpush2.msra.mxu0 0.0
    %591 = vmatprep.subr.mxu0 0.0
    %592 = vmatpush2.msra.mxu0 0.0
    %593 = vmatprep.subr.mxu0 0.0
    %594 = vmatpush2.msra.mxu0 0.0
    %595 = vmatprep.subr.mxu0 0.0
    %596 = vmatpush2.msra.mxu0 0.0
    %597 = vmatprep.subr.mxu0 0.0
    %598 = vmatpush2.msra.mxu0 0.0
    %599 = vmatprep.mubr.f32.mxu0 0.0
    %600 = vmatmul.mubr.f32.gmra.mxu0 %v524
    %v601 = vpop.f32.mrf.mxu0
    %v602 = vadd.f32 %v501, %v601
    %v603 = vpop.f32.mrf.mxu0
    %v604 = vadd.f32 %v503, %v603
    %605 = vmatprep.mubr.f32.mxu0 0.0
    %606 = vmatmul.mubr.f32.gmra.mxu0 %v527
    %v607 = vpop.f32.mrf.mxu0
    %v608 = vadd.f32 %v507, %v607
    %v609 = vpop.f32.mrf.mxu0
    %v610 = vadd.f32 %v509, %v609
    %611 = vmatprep.mubr.f32.mxu0 0.0
    %612 = vmatmul.mubr.f32.gmra.mxu0 %v530
    %v613 = vpop.f32.mrf.mxu0
    %v614 = vadd.f32 %v513, %v613
    %v615 = vpop.f32.mrf.mxu0
    %v616 = vadd.f32 %v515, %v615
    %617 = vmatprep.mubr.f32.mxu0 0.0
    %618 = vmatmul.mubr.f32.gmra.mxu0 %v533
    %v619 = vpop.f32.mrf.mxu0
    %v620 = vadd.f32 %v519, %v619
    %v621 = vpop.f32.mrf.mxu0
    %v622 = vadd.f32 %v521, %v621
    %623 = vdwg.mxu0
    %v624 = vmax.f32 %v602, 0.0
    %v625 = vmax.f32 %v604, 0.0
    %v626 = vmax.f32 %v608, 0.0
    %v627 = vmax.f32 %v610, 0.0
    %v628 = vmax.f32 %v614, 0.0
    %v629 = vmax.f32 %v616, 0.0
    %v630 = vmax.f32 %v620, 0.0
    %v631 = vmax.f32 %v622, 0.0
    %vm632 = vcmp.ge.f32.partialorder %v602, 0.01
    %vm633 = vcmp.ge.f32.partialorder %v604, 0.01
    %vm634 = vcmp.ge.f32.partialorder %v608, 0.01
    %vm635 = vcmp.ge.f32.partialorder %v610, 0.01
    %vm636 = vcmp.ge.f32.partialorder %v614, 0.01
    %vm637 = vcmp.ge.f32.partialorder %v616, 0.01
    %vm638 = vcmp.ge.f32.partialorder %v620, 0.01
    %vm639 = vcmp.ge.f32.partialorder %v622, 0.01
    %v640 = vmul.f32 %v624, %v624
    %v641 = vmul.f32 %v625, %v625
    %v642 = vmul.f32 %v626, %v626
    %v643 = vmul.f32 %v627, %v627
    %v644 = vmul.f32 %v628, %v628
    %v645 = vmul.f32 %v629, %v629
    %v646 = vmul.f32 %v630, %v630
    %v647 = vmul.f32 %v631, %v631
    %v648 = vmul.f32 %v640, 50.0
    %v649 = vmul.f32 %v641, 50.0
    %v650 = vmul.f32 %v642, 50.0
    %v651 = vmul.f32 %v643, 50.0
    %v652 = vmul.f32 %v644, 50.0
    %v653 = vmul.f32 %v645, 50.0
    %v654 = vmul.f32 %v646, 50.0
    %v655 = vmul.f32 %v647, 50.0
    %v656 = vsel %vm632, %v602, %v648
    %v657 = vsel %vm633, %v604, %v649
    %v658 = vsel %vm634, %v608, %v650
    %v659 = vsel %vm635, %v610, %v651
    %v660 = vsel %vm636, %v614, %v652
    %v661 = vsel %vm637, %v616, %v653
    %v662 = vsel %vm638, %v620, %v654
    %v663 = vsel %vm639, %v622, %v655
    %v664 = vld [vmem:[%s2 + $0x40] sm:$0xff]
    %v665 = vld [vmem:[%s1 + $0x60] sm:$0xff]
    %v667 = vsel %vm21, %v665, 0
    %669 = vmatprep.subr.mxu0 0.0
    %670 = vmatpush1.msra.mxu0 0.0
    %671 = vmatprep.subr.mxu0 0.0
    %672 = vmatpush1.msra.mxu0 0.0
    %673 = vmatprep.subr.mxu0 0.0
    %674 = vmatpush1.msra.mxu0 0.0
    %675 = vmatprep.subr.mxu0 0.0
    %676 = vmatpush1.msra.mxu0 0.0
    %677 = vmatprep.subr.mxu0 0.0
    %678 = vmatpush1.msra.mxu0 0.0
    %679 = vmatprep.subr.mxu0 0.0
    %680 = vmatpush1.msra.mxu0 0.0
    %681 = vmatprep.subr.mxu0 0.0
    %682 = vmatpush1.msra.mxu0 0.0
    %683 = vmatprep.subr.mxu0 0.0
    %684 = vmatpush1.msra.mxu0 0.0
    %685 = vmatprep.subr.mxu0 0.0
    %686 = vmatpush1.msra.mxu0 0.0
    %687 = vmatprep.subr.mxu0 0.0
    %688 = vmatpush1.msra.mxu0 0.0
    %689 = vmatprep.subr.mxu0 0.0
    %690 = vmatpush1.msra.mxu0 0.0
    %691 = vmatprep.subr.mxu0 0.0
    %692 = vmatpush1.msra.mxu0 0.0
    %693 = vmatprep.subr.mxu0 0.0
    %694 = vmatpush1.msra.mxu0 0.0
    %695 = vmatprep.subr.mxu0 0.0
    %696 = vmatpush1.msra.mxu0 0.0
    %697 = vmatprep.subr.mxu0 0.0
    %698 = vmatpush1.msra.mxu0 0.0
    %699 = vmatprep.subr.mxu0 %v16
    %700 = vmatpush1.msra.mxu0 %v15
    %701 = vmatprep.subr.mxu0 0.0
    %702 = vmatpush2.msra.mxu0 0.0
    %703 = vmatprep.subr.mxu0 0.0
    %704 = vmatpush2.msra.mxu0 0.0
    %705 = vmatprep.subr.mxu0 0.0
    %706 = vmatpush2.msra.mxu0 0.0
    %707 = vmatprep.subr.mxu0 0.0
    %708 = vmatpush2.msra.mxu0 0.0
    %709 = vmatprep.subr.mxu0 0.0
    %710 = vmatpush2.msra.mxu0 0.0
    %711 = vmatprep.subr.mxu0 0.0
    %712 = vmatpush2.msra.mxu0 0.0
    %713 = vmatprep.subr.mxu0 0.0
    %714 = vmatpush2.msra.mxu0 0.0
    %715 = vmatprep.subr.mxu0 0.0
    %716 = vmatpush2.msra.mxu0 0.0
    %717 = vmatprep.subr.mxu0 0.0
    %718 = vmatpush2.msra.mxu0 0.0
    %719 = vmatprep.subr.mxu0 0.0
    %720 = vmatpush2.msra.mxu0 0.0
    %721 = vmatprep.subr.mxu0 0.0
    %722 = vmatpush2.msra.mxu0 0.0
    %723 = vmatprep.subr.mxu0 0.0
    %724 = vmatpush2.msra.mxu0 0.0
    %725 = vmatprep.subr.mxu0 0.0
    %726 = vmatpush2.msra.mxu0 0.0
    %727 = vmatprep.subr.mxu0 0.0
    %728 = vmatpush2.msra.mxu0 0.0
    %729 = vmatprep.subr.mxu0 0.0
    %730 = vmatpush2.msra.mxu0 0.0
    %731 = vmatprep.subr.mxu0 0.0
    %732 = vmatpush2.msra.mxu0 0.0
    %733 = vmatprep.mubr.f32.mxu0 0.0
    %734 = vmatmul.mubr.f32.gmra.mxu0 %v667
    %v735 = vpop.f32.mrf.mxu0
    %v736 = vadd.f32 0.0, %v735
    %v737 = vpop.f32.mrf.mxu0
    %v738 = vadd.f32 0.0, %v737
    %739 = vdwg.mxu0
    %v741 = vsel %vm272, %v664, 0
    %743 = vmatprep.subr.mxu0 0.0
    %744 = vmatpush1.msra.mxu0 0.0
    %745 = vmatprep.subr.mxu0 0.0
    %746 = vmatpush1.msra.mxu0 0.0
    %747 = vmatprep.subr.mxu0 0.0
    %748 = vmatpush1.msra.mxu0 0.0
    %749 = vmatprep.subr.mxu0 0.0
    %750 = vmatpush1.msra.mxu0 0.0
    %751 = vmatprep.subr.mxu0 0.0
    %752 = vmatpush1.msra.mxu0 0.0
    %753 = vmatprep.subr.mxu0 0.0
    %754 = vmatpush1.msra.mxu0 0.0
    %755 = vmatprep.subr.mxu0 0.0
    %756 = vmatpush1.msra.mxu0 0.0
    %757 = vmatprep.subr.mxu0 0.0
    %758 = vmatpush1.msra.mxu0 0.0
    %759 = vmatprep.subr.mxu0 0.0
    %760 = vmatpush1.msra.mxu0 0.0
    %761 = vmatprep.subr.mxu0 0.0
    %762 = vmatpush1.msra.mxu0 0.0
    %763 = vmatprep.subr.mxu0 0.0
    %764 = vmatpush1.msra.mxu0 0.0
    %765 = vmatprep.subr.mxu0 0.0
    %766 = vmatpush1.msra.mxu0 0.0
    %767 = vmatprep.subr.mxu0 %v663
    %768 = vmatpush1.msra.mxu0 %v662
    %769 = vmatprep.subr.mxu0 %v661
    %770 = vmatpush1.msra.mxu0 %v660
    %771 = vmatprep.subr.mxu0 %v659
    %772 = vmatpush1.msra.mxu0 %v658
    %773 = vmatprep.subr.mxu0 %v657
    %774 = vmatpush1.msra.mxu0 %v656
    %775 = vmatprep.subr.mxu0 0.0
    %776 = vmatpush2.msra.mxu0 0.0
    %777 = vmatprep.subr.mxu0 0.0
    %778 = vmatpush2.msra.mxu0 0.0
    %779 = vmatprep.subr.mxu0 0.0
    %780 = vmatpush2.msra.mxu0 0.0
    %781 = vmatprep.subr.mxu0 0.0
    %782 = vmatpush2.msra.mxu0 0.0
    %783 = vmatprep.subr.mxu0 0.0
    %784 = vmatpush2.msra.mxu0 0.0
    %785 = vmatprep.subr.mxu0 0.0
    %786 = vmatpush2.msra.mxu0 0.0
    %787 = vmatprep.subr.mxu0 0.0
    %788 = vmatpush2.msra.mxu0 0.0
    %789 = vmatprep.subr.mxu0 0.0
    %790 = vmatpush2.msra.mxu0 0.0
    %791 = vmatprep.subr.mxu0 0.0
    %792 = vmatpush2.msra.mxu0 0.0
    %793 = vmatprep.subr.mxu0 0.0
    %794 = vmatpush2.msra.mxu0 0.0
    %795 = vmatprep.subr.mxu0 0.0
    %796 = vmatpush2.msra.mxu0 0.0
    %797 = vmatprep.subr.mxu0 0.0
    %798 = vmatpush2.msra.mxu0 0.0
    %799 = vmatprep.subr.mxu0 0.0
    %800 = vmatpush2.msra.mxu0 0.0
    %801 = vmatprep.subr.mxu0 0.0
    %802 = vmatpush2.msra.mxu0 0.0
    %803 = vmatprep.subr.mxu0 0.0
    %804 = vmatpush2.msra.mxu0 0.0
    %805 = vmatprep.subr.mxu0 0.0
    %806 = vmatpush2.msra.mxu0 0.0
    %807 = vmatprep.mubr.f32.mxu0 0.0
    %808 = vmatmul.mubr.f32.gmra.mxu0 %v741
    %v809 = vpop.f32.mrf.mxu0
    %v810 = vadd.f32 %v736, %v809
    %v811 = vpop.f32.mrf.mxu0
    %v812 = vadd.f32 %v738, %v811
    %813 = vdwg.mxu0
    %v814 = vmax.f32 %v810, 0.0
    %v815 = vmax.f32 %v812, 0.0
    %vm816 = vcmp.ge.f32.partialorder %v810, 0.01
    %vm817 = vcmp.ge.f32.partialorder %v812, 0.01
    %v818 = vmul.f32 %v814, %v814
    %v819 = vmul.f32 %v815, %v815
    %v820 = vmul.f32 %v818, 50.0
    %v821 = vmul.f32 %v819, 50.0
    %v822 = vsel %vm816, %v810, %v820
    %v823 = vsel %vm817, %v812, %v821
    %v826 = vcombine.low %v822, %v823
    %v828 = vunpack.c.l.s4 1966171168
    %v829 = vunpack.c.0.s8 %v828
    %v830 = vlaneseq
    %v831 = vshrl.u32 %v830, 7
    %v832 = vsub.s32 %v829, %v831
    %v833 = vrot.slane %v826, %v832
    %v835 = vunpack.c.l.s4 1966171168
    %v836 = vunpack.c.0.s8 %v835
    %v837 = vlaneseq
    %v838 = vshrl.u32 %v837, 7
    %v839 = vsub.s32 %v836, %v838
    %v840 = vrot.slane %v833, %v839
    %v842 = vlaneseq
    %vm843 = vcmp.ge.s32.totalorder %v842, 0
    %vm844 = vcmp.lt.s32.totalorder %v842, 256
    %vm845 = vmand %vm843, %vm844
    %846 = vst.msk [vmem:[#allocation2] sm:$0x3] %vm845, %v840
    %s847 = scalar_lea.vmem %s0, 16
    %v848 = vld [vmem:[%s847] sm:$0xff]
    %v849 = vld [vmem:[%s847 + $0x8] sm:$0xff]
    %v850 = vld [vmem:[%s1] sm:$0xff]
    %v851 = vld [vmem:[%s1 + $0x8] sm:$0xff]
    %v852 = vld [vmem:[%s1 + $0x10] sm:$0xff]
    %v853 = vld [vmem:[%s1 + $0x18] sm:$0xff]
    %v855 = vsel %vm21, %v850, 0
    %v858 = vsel %vm21, %v851, 0
    %v861 = vsel %vm21, %v852, 0
    %v864 = vsel %vm21, %v853, 0
    %866 = vmatprep.subr.mxu0 0.0
    %867 = vmatpush1.msra.mxu0 0.0
    %868 = vmatprep.subr.mxu0 0.0
    %869 = vmatpush1.msra.mxu0 0.0
    %870 = vmatprep.subr.mxu0 0.0
    %871 = vmatpush1.msra.mxu0 0.0
    %872 = vmatprep.subr.mxu0 0.0
    %873 = vmatpush1.msra.mxu0 0.0
    %874 = vmatprep.subr.mxu0 0.0
    %875 = vmatpush1.msra.mxu0 0.0
    %876 = vmatprep.subr.mxu0 0.0
    %877 = vmatpush1.msra.mxu0 0.0
    %878 = vmatprep.subr.mxu0 0.0
    %879 = vmatpush1.msra.mxu0 0.0
    %880 = vmatprep.subr.mxu0 0.0
    %881 = vmatpush1.msra.mxu0 0.0
    %882 = vmatprep.subr.mxu0 0.0
    %883 = vmatpush1.msra.mxu0 0.0
    %884 = vmatprep.subr.mxu0 0.0
    %885 = vmatpush1.msra.mxu0 0.0
    %886 = vmatprep.subr.mxu0 0.0
    %887 = vmatpush1.msra.mxu0 0.0
    %888 = vmatprep.subr.mxu0 0.0
    %889 = vmatpush1.msra.mxu0 0.0
    %890 = vmatprep.subr.mxu0 0.0
    %891 = vmatpush1.msra.mxu0 0.0
    %892 = vmatprep.subr.mxu0 0.0
    %893 = vmatpush1.msra.mxu0 0.0
    %894 = vmatprep.subr.mxu0 0.0
    %895 = vmatpush1.msra.mxu0 0.0
    %896 = vmatprep.subr.mxu0 %v849
    %897 = vmatpush1.msra.mxu0 %v848
    %898 = vmatprep.subr.mxu0 0.0
    %899 = vmatpush2.msra.mxu0 0.0
    %900 = vmatprep.subr.mxu0 0.0
    %901 = vmatpush2.msra.mxu0 0.0
    %902 = vmatprep.subr.mxu0 0.0
    %903 = vmatpush2.msra.mxu0 0.0
    %904 = vmatprep.subr.mxu0 0.0
    %905 = vmatpush2.msra.mxu0 0.0
    %906 = vmatprep.subr.mxu0 0.0
    %907 = vmatpush2.msra.mxu0 0.0
    %908 = vmatprep.subr.mxu0 0.0
    %909 = vmatpush2.msra.mxu0 0.0
    %910 = vmatprep.subr.mxu0 0.0
    %911 = vmatpush2.msra.mxu0 0.0
    %912 = vmatprep.subr.mxu0 0.0
    %913 = vmatpush2.msra.mxu0 0.0
    %914 = vmatprep.subr.mxu0 0.0
    %915 = vmatpush2.msra.mxu0 0.0
    %916 = vmatprep.subr.mxu0 0.0
    %917 = vmatpush2.msra.mxu0 0.0
    %918 = vmatprep.subr.mxu0 0.0
    %919 = vmatpush2.msra.mxu0 0.0
    %920 = vmatprep.subr.mxu0 0.0
    %921 = vmatpush2.msra.mxu0 0.0
    %922 = vmatprep.subr.mxu0 0.0
    %923 = vmatpush2.msra.mxu0 0.0
    %924 = vmatprep.subr.mxu0 0.0
    %925 = vmatpush2.msra.mxu0 0.0
    %926 = vmatprep.subr.mxu0 0.0
    %927 = vmatpush2.msra.mxu0 0.0
    %928 = vmatprep.subr.mxu0 0.0
    %929 = vmatpush2.msra.mxu0 0.0
    %930 = vmatprep.mubr.f32.mxu0 0.0
    %931 = vmatmul.mubr.f32.gmra.mxu0 %v855
    %v932 = vpop.f32.mrf.mxu0
    %v933 = vadd.f32 0.0, %v932
    %v934 = vpop.f32.mrf.mxu0
    %v935 = vadd.f32 0.0, %v934
    %936 = vmatprep.mubr.f32.mxu0 0.0
    %937 = vmatmul.mubr.f32.gmra.mxu0 %v858
    %v938 = vpop.f32.mrf.mxu0
    %v939 = vadd.f32 0.0, %v938
    %v940 = vpop.f32.mrf.mxu0
    %v941 = vadd.f32 0.0, %v940
    %942 = vmatprep.mubr.f32.mxu0 0.0
    %943 = vmatmul.mubr.f32.gmra.mxu0 %v861
    %v944 = vpop.f32.mrf.mxu0
    %v945 = vadd.f32 0.0, %v944
    %v946 = vpop.f32.mrf.mxu0
    %v947 = vadd.f32 0.0, %v946
    %948 = vmatprep.mubr.f32.mxu0 0.0
    %949 = vmatmul.mubr.f32.gmra.mxu0 %v864
    %v950 = vpop.f32.mrf.mxu0
    %v951 = vadd.f32 0.0, %v950
    %v952 = vpop.f32.mrf.mxu0
    %v953 = vadd.f32 0.0, %v952
    %954 = vdwg.mxu0
    %v955 = vmax.f32 %v933, 0.0
    %v956 = vmax.f32 %v935, 0.0
    %v957 = vmax.f32 %v939, 0.0
    %v958 = vmax.f32 %v941, 0.0
    %v959 = vmax.f32 %v945, 0.0
    %v960 = vmax.f32 %v947, 0.0
    %v961 = vmax.f32 %v951, 0.0
    %v962 = vmax.f32 %v953, 0.0
    %vm963 = vcmp.ge.f32.partialorder %v933, 0.01
    %vm964 = vcmp.ge.f32.partialorder %v935, 0.01
    %vm965 = vcmp.ge.f32.partialorder %v939, 0.01
    %vm966 = vcmp.ge.f32.partialorder %v941, 0.01
    %vm967 = vcmp.ge.f32.partialorder %v945, 0.01
    %vm968 = vcmp.ge.f32.partialorder %v947, 0.01
    %vm969 = vcmp.ge.f32.partialorder %v951, 0.01
    %vm970 = vcmp.ge.f32.partialorder %v953, 0.01
    %v971 = vmul.f32 %v955, %v955
    %v972 = vmul.f32 %v956, %v956
    %v973 = vmul.f32 %v957, %v957
    %v974 = vmul.f32 %v958, %v958
    %v975 = vmul.f32 %v959, %v959
    %v976 = vmul.f32 %v960, %v960
    %v977 = vmul.f32 %v961, %v961
    %v978 = vmul.f32 %v962, %v962
    %v979 = vmul.f32 %v971, 50.0
    %v980 = vmul.f32 %v972, 50.0
    %v981 = vmul.f32 %v973, 50.0
    %v982 = vmul.f32 %v974, 50.0
    %v983 = vmul.f32 %v975, 50.0
    %v984 = vmul.f32 %v976, 50.0
    %v985 = vmul.f32 %v977, 50.0
    %v986 = vmul.f32 %v978, 50.0
    %v987 = vsel %vm963, %v933, %v979
    %v988 = vsel %vm964, %v935, %v980
    %v989 = vsel %vm965, %v939, %v981
    %v990 = vsel %vm966, %v941, %v982
    %v991 = vsel %vm967, %v945, %v983
    %v992 = vsel %vm968, %v947, %v984
    %v993 = vsel %vm969, %v951, %v985
    %v994 = vsel %vm970, %v953, %v986
    %v995 = vld [vmem:[%s2] sm:$0xff]
    %v996 = vld [vmem:[%s2 + $0x8] sm:$0xff]
    %v997 = vld [vmem:[%s2 + $0x10] sm:$0xff]
    %v998 = vld [vmem:[%s2 + $0x18] sm:$0xff]
    %v999 = vld [vmem:[%s1 + $0x20] sm:$0xff]
    %v1000 = vld [vmem:[%s1 + $0x28] sm:$0xff]
    %v1001 = vld [vmem:[%s1 + $0x30] sm:$0xff]
    %v1002 = vld [vmem:[%s1 + $0x38] sm:$0xff]
    %v1004 = vsel %vm21, %v999, 0
    %v1007 = vsel %vm21, %v1000, 0
    %v1010 = vsel %vm21, %v1001, 0
    %v1013 = vsel %vm21, %v1002, 0
    %1015 = vmatprep.subr.mxu0 0.0
    %1016 = vmatpush1.msra.mxu0 0.0
    %1017 = vmatprep.subr.mxu0 0.0
    %1018 = vmatpush1.msra.mxu0 0.0
    %1019 = vmatprep.subr.mxu0 0.0
    %1020 = vmatpush1.msra.mxu0 0.0
    %1021 = vmatprep.subr.mxu0 0.0
    %1022 = vmatpush1.msra.mxu0 0.0
    %1023 = vmatprep.subr.mxu0 0.0
    %1024 = vmatpush1.msra.mxu0 0.0
    %1025 = vmatprep.subr.mxu0 0.0
    %1026 = vmatpush1.msra.mxu0 0.0
    %1027 = vmatprep.subr.mxu0 0.0
    %1028 = vmatpush1.msra.mxu0 0.0
    %1029 = vmatprep.subr.mxu0 0.0
    %1030 = vmatpush1.msra.mxu0 0.0
    %1031 = vmatprep.subr.mxu0 0.0
    %1032 = vmatpush1.msra.mxu0 0.0
    %1033 = vmatprep.subr.mxu0 0.0
    %1034 = vmatpush1.msra.mxu0 0.0
    %1035 = vmatprep.subr.mxu0 0.0
    %1036 = vmatpush1.msra.mxu0 0.0
    %1037 = vmatprep.subr.mxu0 0.0
    %1038 = vmatpush1.msra.mxu0 0.0
    %1039 = vmatprep.subr.mxu0 0.0
    %1040 = vmatpush1.msra.mxu0 0.0
    %1041 = vmatprep.subr.mxu0 0.0
    %1042 = vmatpush1.msra.mxu0 0.0
    %1043 = vmatprep.subr.mxu0 0.0
    %1044 = vmatpush1.msra.mxu0 0.0
    %1045 = vmatprep.subr.mxu0 %v849
    %1046 = vmatpush1.msra.mxu0 %v848
    %1047 = vmatprep.subr.mxu0 0.0
    %1048 = vmatpush2.msra.mxu0 0.0
    %1049 = vmatprep.subr.mxu0 0.0
    %1050 = vmatpush2.msra.mxu0 0.0
    %1051 = vmatprep.subr.mxu0 0.0
    %1052 = vmatpush2.msra.mxu0 0.0
    %1053 = vmatprep.subr.mxu0 0.0
    %1054 = vmatpush2.msra.mxu0 0.0
    %1055 = vmatprep.subr.mxu0 0.0
    %1056 = vmatpush2.msra.mxu0 0.0
    %1057 = vmatprep.subr.mxu0 0.0
    %1058 = vmatpush2.msra.mxu0 0.0
    %1059 = vmatprep.subr.mxu0 0.0
    %1060 = vmatpush2.msra.mxu0 0.0
    %1061 = vmatprep.subr.mxu0 0.0
    %1062 = vmatpush2.msra.mxu0 0.0
    %1063 = vmatprep.subr.mxu0 0.0
    %1064 = vmatpush2.msra.mxu0 0.0
    %1065 = vmatprep.subr.mxu0 0.0
    %1066 = vmatpush2.msra.mxu0 0.0
    %1067 = vmatprep.subr.mxu0 0.0
    %1068 = vmatpush2.msra.mxu0 0.0
    %1069 = vmatprep.subr.mxu0 0.0
    %1070 = vmatpush2.msra.mxu0 0.0
    %1071 = vmatprep.subr.mxu0 0.0
    %1072 = vmatpush2.msra.mxu0 0.0
    %1073 = vmatprep.subr.mxu0 0.0
    %1074 = vmatpush2.msra.mxu0 0.0
    %1075 = vmatprep.subr.mxu0 0.0
    %1076 = vmatpush2.msra.mxu0 0.0
    %1077 = vmatprep.subr.mxu0 0.0
    %1078 = vmatpush2.msra.mxu0 0.0
    %1079 = vmatprep.mubr.f32.mxu0 0.0
    %1080 = vmatmul.mubr.f32.gmra.mxu0 %v1004
    %v1081 = vpop.f32.mrf.mxu0
    %v1082 = vadd.f32 0.0, %v1081
    %v1083 = vpop.f32.mrf.mxu0
    %v1084 = vadd.f32 0.0, %v1083
    %1085 = vmatprep.mubr.f32.mxu0 0.0
    %1086 = vmatmul.mubr.f32.gmra.mxu0 %v1007
    %v1087 = vpop.f32.mrf.mxu0
    %v1088 = vadd.f32 0.0, %v1087
    %v1089 = vpop.f32.mrf.mxu0
    %v1090 = vadd.f32 0.0, %v1089
    %1091 = vmatprep.mubr.f32.mxu0 0.0
    %1092 = vmatmul.mubr.f32.gmra.mxu0 %v1010
    %v1093 = vpop.f32.mrf.mxu0
    %v1094 = vadd.f32 0.0, %v1093
    %v1095 = vpop.f32.mrf.mxu0
    %v1096 = vadd.f32 0.0, %v1095
    %1097 = vmatprep.mubr.f32.mxu0 0.0
    %1098 = vmatmul.mubr.f32.gmra.mxu0 %v1013
    %v1099 = vpop.f32.mrf.mxu0
    %v1100 = vadd.f32 0.0, %v1099
    %v1101 = vpop.f32.mrf.mxu0
    %v1102 = vadd.f32 0.0, %v1101
    %1103 = vdwg.mxu0
    %v1105 = vsel %vm272, %v995, 0
    %v1108 = vsel %vm272, %v996, 0
    %v1111 = vsel %vm272, %v997, 0
    %v1114 = vsel %vm272, %v998, 0
    %1116 = vmatprep.subr.mxu0 0.0
    %1117 = vmatpush1.msra.mxu0 0.0
    %1118 = vmatprep.subr.mxu0 0.0
    %1119 = vmatpush1.msra.mxu0 0.0
    %1120 = vmatprep.subr.mxu0 0.0
    %1121 = vmatpush1.msra.mxu0 0.0
    %1122 = vmatprep.subr.mxu0 0.0
    %1123 = vmatpush1.msra.mxu0 0.0
    %1124 = vmatprep.subr.mxu0 0.0
    %1125 = vmatpush1.msra.mxu0 0.0
    %1126 = vmatprep.subr.mxu0 0.0
    %1127 = vmatpush1.msra.mxu0 0.0
    %1128 = vmatprep.subr.mxu0 0.0
    %1129 = vmatpush1.msra.mxu0 0.0
    %1130 = vmatprep.subr.mxu0 0.0
    %1131 = vmatpush1.msra.mxu0 0.0
    %1132 = vmatprep.subr.mxu0 0.0
    %1133 = vmatpush1.msra.mxu0 0.0
    %1134 = vmatprep.subr.mxu0 0.0
    %1135 = vmatpush1.msra.mxu0 0.0
    %1136 = vmatprep.subr.mxu0 0.0
    %1137 = vmatpush1.msra.mxu0 0.0
    %1138 = vmatprep.subr.mxu0 0.0
    %1139 = vmatpush1.msra.mxu0 0.0
    %1140 = vmatprep.subr.mxu0 %v994
    %1141 = vmatpush1.msra.mxu0 %v993
    %1142 = vmatprep.subr.mxu0 %v992
    %1143 = vmatpush1.msra.mxu0 %v991
    %1144 = vmatprep.subr.mxu0 %v990
    %1145 = vmatpush1.msra.mxu0 %v989
    %1146 = vmatprep.subr.mxu0 %v988
    %1147 = vmatpush1.msra.mxu0 %v987
    %1148 = vmatprep.subr.mxu0 0.0
    %1149 = vmatpush2.msra.mxu0 0.0
    %1150 = vmatprep.subr.mxu0 0.0
    %1151 = vmatpush2.msra.mxu0 0.0
    %1152 = vmatprep.subr.mxu0 0.0
    %1153 = vmatpush2.msra.mxu0 0.0
    %1154 = vmatprep.subr.mxu0 0.0
    %1155 = vmatpush2.msra.mxu0 0.0
    %1156 = vmatprep.subr.mxu0 0.0
    %1157 = vmatpush2.msra.mxu0 0.0
    %1158 = vmatprep.subr.mxu0 0.0
    %1159 = vmatpush2.msra.mxu0 0.0
    %1160 = vmatprep.subr.mxu0 0.0
    %1161 = vmatpush2.msra.mxu0 0.0
    %1162 = vmatprep.subr.mxu0 0.0
    %1163 = vmatpush2.msra.mxu0 0.0
    %1164 = vmatprep.subr.mxu0 0.0
    %1165 = vmatpush2.msra.mxu0 0.0
    %1166 = vmatprep.subr.mxu0 0.0
    %1167 = vmatpush2.msra.mxu0 0.0
    %1168 = vmatprep.subr.mxu0 0.0
    %1169 = vmatpush2.msra.mxu0 0.0
    %1170 = vmatprep.subr.mxu0 0.0
    %1171 = vmatpush2.msra.mxu0 0.0
    %1172 = vmatprep.subr.mxu0 0.0
    %1173 = vmatpush2.msra.mxu0 0.0
    %1174 = vmatprep.subr.mxu0 0.0
    %1175 = vmatpush2.msra.mxu0 0.0
    %1176 = vmatprep.subr.mxu0 0.0
    %1177 = vmatpush2.msra.mxu0 0.0
    %1178 = vmatprep.subr.mxu0 0.0
    %1179 = vmatpush2.msra.mxu0 0.0
    %1180 = vmatprep.mubr.f32.mxu0 0.0
    %1181 = vmatmul.mubr.f32.gmra.mxu0 %v1105
    %v1182 = vpop.f32.mrf.mxu0
    %v1183 = vadd.f32 %v1082, %v1182
    %v1184 = vpop.f32.mrf.mxu0
    %v1185 = vadd.f32 %v1084, %v1184
    %1186 = vmatprep.mubr.f32.mxu0 0.0
    %1187 = vmatmul.mubr.f32.gmra.mxu0 %v1108
    %v1188 = vpop.f32.mrf.mxu0
    %v1189 = vadd.f32 %v1088, %v1188
    %v1190 = vpop.f32.mrf.mxu0
    %v1191 = vadd.f32 %v1090, %v1190
    %1192 = vmatprep.mubr.f32.mxu0 0.0
    %1193 = vmatmul.mubr.f32.gmra.mxu0 %v1111
    %v1194 = vpop.f32.mrf.mxu0
    %v1195 = vadd.f32 %v1094, %v1194
    %v1196 = vpop.f32.mrf.mxu0
    %v1197 = vadd.f32 %v1096, %v1196
    %1198 = vmatprep.mubr.f32.mxu0 0.0
    %1199 = vmatmul.mubr.f32.gmra.mxu0 %v1114
    %v1200 = vpop.f32.mrf.mxu0
    %v1201 = vadd.f32 %v1100, %v1200
    %v1202 = vpop.f32.mrf.mxu0
    %v1203 = vadd.f32 %v1102, %v1202
    %1204 = vdwg.mxu0
    %v1205 = vmax.f32 %v1183, 0.0
    %v1206 = vmax.f32 %v1185, 0.0
    %v1207 = vmax.f32 %v1189, 0.0
    %v1208 = vmax.f32 %v1191, 0.0
    %v1209 = vmax.f32 %v1195, 0.0
    %v1210 = vmax.f32 %v1197, 0.0
    %v1211 = vmax.f32 %v1201, 0.0
    %v1212 = vmax.f32 %v1203, 0.0
    %vm1213 = vcmp.ge.f32.partialorder %v1183, 0.01
    %vm1214 = vcmp.ge.f32.partialorder %v1185, 0.01
    %vm1215 = vcmp.ge.f32.partialorder %v1189, 0.01
    %vm1216 = vcmp.ge.f32.partialorder %v1191, 0.01
    %vm1217 = vcmp.ge.f32.partialorder %v1195, 0.01
    %vm1218 = vcmp.ge.f32.partialorder %v1197, 0.01
    %vm1219 = vcmp.ge.f32.partialorder %v1201, 0.01
    %vm1220 = vcmp.ge.f32.partialorder %v1203, 0.01
    %v1221 = vmul.f32 %v1205, %v1205
    %v1222 = vmul.f32 %v1206, %v1206
    %v1223 = vmul.f32 %v1207, %v1207
    %v1224 = vmul.f32 %v1208, %v1208
    %v1225 = vmul.f32 %v1209, %v1209
    %v1226 = vmul.f32 %v1210, %v1210
    %v1227 = vmul.f32 %v1211, %v1211
    %v1228 = vmul.f32 %v1212, %v1212
    %v1229 = vmul.f32 %v1221, 50.0
    %v1230 = vmul.f32 %v1222, 50.0
    %v1231 = vmul.f32 %v1223, 50.0
    %v1232 = vmul.f32 %v1224, 50.0
    %v1233 = vmul.f32 %v1225, 50.0
    %v1234 = vmul.f32 %v1226, 50.0
    %v1235 = vmul.f32 %v1227, 50.0
    %v1236 = vmul.f32 %v1228, 50.0
    %v1237 = vsel %vm1213, %v1183, %v1229
    %v1238 = vsel %vm1214, %v1185, %v1230
    %v1239 = vsel %vm1215, %v1189, %v1231
    %v1240 = vsel %vm1216, %v1191, %v1232
    %v1241 = vsel %vm1217, %v1195, %v1233
    %v1242 = vsel %vm1218, %v1197, %v1234
    %v1243 = vsel %vm1219, %v1201, %v1235
    %v1244 = vsel %vm1220, %v1203, %v1236
    %v1245 = vld [vmem:[%s2 + $0x20] sm:$0xff]
    %v1246 = vld [vmem:[%s2 + $0x28] sm:$0xff]
    %v1247 = vld [vmem:[%s2 + $0x30] sm:$0xff]
    %v1248 = vld [vmem:[%s2 + $0x38] sm:$0xff]
    %v1249 = vld [vmem:[%s1 + $0x40] sm:$0xff]
    %v1250 = vld [vmem:[%s1 + $0x48] sm:$0xff]
    %v1251 = vld [vmem:[%s1 + $0x50] sm:$0xff]
    %v1252 = vld [vmem:[%s1 + $0x58] sm:$0xff]
    %v1254 = vsel %vm21, %v1249, 0
    %v1257 = vsel %vm21, %v1250, 0
    %v1260 = vsel %vm21, %v1251, 0
    %v1263 = vsel %vm21, %v1252, 0
    %1265 = vmatprep.subr.mxu0 0.0
    %1266 = vmatpush1.msra.mxu0 0.0
    %1267 = vmatprep.subr.mxu0 0.0
    %1268 = vmatpush1.msra.mxu0 0.0
    %1269 = vmatprep.subr.mxu0 0.0
    %1270 = vmatpush1.msra.mxu0 0.0
    %1271 = vmatprep.subr.mxu0 0.0
    %1272 = vmatpush1.msra.mxu0 0.0
    %1273 = vmatprep.subr.mxu0 0.0
    %1274 = vmatpush1.msra.mxu0 0.0
    %1275 = vmatprep.subr.mxu0 0.0
    %1276 = vmatpush1.msra.mxu0 0.0
    %1277 = vmatprep.subr.mxu0 0.0
    %1278 = vmatpush1.msra.mxu0 0.0
    %1279 = vmatprep.subr.mxu0 0.0
    %1280 = vmatpush1.msra.mxu0 0.0
    %1281 = vmatprep.subr.mxu0 0.0
    %1282 = vmatpush1.msra.mxu0 0.0
    %1283 = vmatprep.subr.mxu0 0.0
    %1284 = vmatpush1.msra.mxu0 0.0
    %1285 = vmatprep.subr.mxu0 0.0
    %1286 = vmatpush1.msra.mxu0 0.0
    %1287 = vmatprep.subr.mxu0 0.0
    %1288 = vmatpush1.msra.mxu0 0.0
    %1289 = vmatprep.subr.mxu0 0.0
    %1290 = vmatpush1.msra.mxu0 0.0
    %1291 = vmatprep.subr.mxu0 0.0
    %1292 = vmatpush1.msra.mxu0 0.0
    %1293 = vmatprep.subr.mxu0 0.0
    %1294 = vmatpush1.msra.mxu0 0.0
    %1295 = vmatprep.subr.mxu0 %v849
    %1296 = vmatpush1.msra.mxu0 %v848
    %1297 = vmatprep.subr.mxu0 0.0
    %1298 = vmatpush2.msra.mxu0 0.0
    %1299 = vmatprep.subr.mxu0 0.0
    %1300 = vmatpush2.msra.mxu0 0.0
    %1301 = vmatprep.subr.mxu0 0.0
    %1302 = vmatpush2.msra.mxu0 0.0
    %1303 = vmatprep.subr.mxu0 0.0
    %1304 = vmatpush2.msra.mxu0 0.0
    %1305 = vmatprep.subr.mxu0 0.0
    %1306 = vmatpush2.msra.mxu0 0.0
    %1307 = vmatprep.subr.mxu0 0.0
    %1308 = vmatpush2.msra.mxu0 0.0
    %1309 = vmatprep.subr.mxu0 0.0
    %1310 = vmatpush2.msra.mxu0 0.0
    %1311 = vmatprep.subr.mxu0 0.0
    %1312 = vmatpush2.msra.mxu0 0.0
    %1313 = vmatprep.subr.mxu0 0.0
    %1314 = vmatpush2.msra.mxu0 0.0
    %1315 = vmatprep.subr.mxu0 0.0
    %1316 = vmatpush2.msra.mxu0 0.0
    %1317 = vmatprep.subr.mxu0 0.0
    %1318 = vmatpush2.msra.mxu0 0.0
    %1319 = vmatprep.subr.mxu0 0.0
    %1320 = vmatpush2.msra.mxu0 0.0
    %1321 = vmatprep.subr.mxu0 0.0
    %1322 = vmatpush2.msra.mxu0 0.0
    %1323 = vmatprep.subr.mxu0 0.0
    %1324 = vmatpush2.msra.mxu0 0.0
    %1325 = vmatprep.subr.mxu0 0.0
    %1326 = vmatpush2.msra.mxu0 0.0
    %1327 = vmatprep.subr.mxu0 0.0
    %1328 = vmatpush2.msra.mxu0 0.0
    %1329 = vmatprep.mubr.f32.mxu0 0.0
    %1330 = vmatmul.mubr.f32.gmra.mxu0 %v1254
    %v1331 = vpop.f32.mrf.mxu0
    %v1332 = vadd.f32 0.0, %v1331
    %v1333 = vpop.f32.mrf.mxu0
    %v1334 = vadd.f32 0.0, %v1333
    %1335 = vmatprep.mubr.f32.mxu0 0.0
    %1336 = vmatmul.mubr.f32.gmra.mxu0 %v1257
    %v1337 = vpop.f32.mrf.mxu0
    %v1338 = vadd.f32 0.0, %v1337
    %v1339 = vpop.f32.mrf.mxu0
    %v1340 = vadd.f32 0.0, %v1339
    %1341 = vmatprep.mubr.f32.mxu0 0.0
    %1342 = vmatmul.mubr.f32.gmra.mxu0 %v1260
    %v1343 = vpop.f32.mrf.mxu0
    %v1344 = vadd.f32 0.0, %v1343
    %v1345 = vpop.f32.mrf.mxu0
    %v1346 = vadd.f32 0.0, %v1345
    %1347 = vmatprep.mubr.f32.mxu0 0.0
    %1348 = vmatmul.mubr.f32.gmra.mxu0 %v1263
    %v1349 = vpop.f32.mrf.mxu0
    %v1350 = vadd.f32 0.0, %v1349
    %v1351 = vpop.f32.mrf.mxu0
    %v1352 = vadd.f32 0.0, %v1351
    %1353 = vdwg.mxu0
    %v1355 = vsel %vm272, %v1245, 0
    %v1358 = vsel %vm272, %v1246, 0
    %v1361 = vsel %vm272, %v1247, 0
    %v1364 = vsel %vm272, %v1248, 0
    %1366 = vmatprep.subr.mxu0 0.0
    %1367 = vmatpush1.msra.mxu0 0.0
    %1368 = vmatprep.subr.mxu0 0.0
    %1369 = vmatpush1.msra.mxu0 0.0
    %1370 = vmatprep.subr.mxu0 0.0
    %1371 = vmatpush1.msra.mxu0 0.0
    %1372 = vmatprep.subr.mxu0 0.0
    %1373 = vmatpush1.msra.mxu0 0.0
    %1374 = vmatprep.subr.mxu0 0.0
    %1375 = vmatpush1.msra.mxu0 0.0
    %1376 = vmatprep.subr.mxu0 0.0
    %1377 = vmatpush1.msra.mxu0 0.0
    %1378 = vmatprep.subr.mxu0 0.0
    %1379 = vmatpush1.msra.mxu0 0.0
    %1380 = vmatprep.subr.mxu0 0.0
    %1381 = vmatpush1.msra.mxu0 0.0
    %1382 = vmatprep.subr.mxu0 0.0
    %1383 = vmatpush1.msra.mxu0 0.0
    %1384 = vmatprep.subr.mxu0 0.0
    %1385 = vmatpush1.msra.mxu0 0.0
    %1386 = vmatprep.subr.mxu0 0.0
    %1387 = vmatpush1.msra.mxu0 0.0
    %1388 = vmatprep.subr.mxu0 0.0
    %1389 = vmatpush1.msra.mxu0 0.0
    %1390 = vmatprep.subr.mxu0 %v1244
    %1391 = vmatpush1.msra.mxu0 %v1243
    %1392 = vmatprep.subr.mxu0 %v1242
    %1393 = vmatpush1.msra.mxu0 %v1241
    %1394 = vmatprep.subr.mxu0 %v1240
    %1395 = vmatpush1.msra.mxu0 %v1239
    %1396 = vmatprep.subr.mxu0 %v1238
    %1397 = vmatpush1.msra.mxu0 %v1237
    %1398 = vmatprep.subr.mxu0 0.0
    %1399 = vmatpush2.msra.mxu0 0.0
    %1400 = vmatprep.subr.mxu0 0.0
    %1401 = vmatpush2.msra.mxu0 0.0
    %1402 = vmatprep.subr.mxu0 0.0
    %1403 = vmatpush2.msra.mxu0 0.0
    %1404 = vmatprep.subr.mxu0 0.0
    %1405 = vmatpush2.msra.mxu0 0.0
    %1406 = vmatprep.subr.mxu0 0.0
    %1407 = vmatpush2.msra.mxu0 0.0
    %1408 = vmatprep.subr.mxu0 0.0
    %1409 = vmatpush2.msra.mxu0 0.0
    %1410 = vmatprep.subr.mxu0 0.0
    %1411 = vmatpush2.msra.mxu0 0.0
    %1412 = vmatprep.subr.mxu0 0.0
    %1413 = vmatpush2.msra.mxu0 0.0
    %1414 = vmatprep.subr.mxu0 0.0
    %1415 = vmatpush2.msra.mxu0 0.0
    %1416 = vmatprep.subr.mxu0 0.0
    %1417 = vmatpush2.msra.mxu0 0.0
    %1418 = vmatprep.subr.mxu0 0.0
    %1419 = vmatpush2.msra.mxu0 0.0
    %1420 = vmatprep.subr.mxu0 0.0
    %1421 = vmatpush2.msra.mxu0 0.0
    %1422 = vmatprep.subr.mxu0 0.0
    %1423 = vmatpush2.msra.mxu0 0.0
    %1424 = vmatprep.subr.mxu0 0.0
    %1425 = vmatpush2.msra.mxu0 0.0
    %1426 = vmatprep.subr.mxu0 0.0
    %1427 = vmatpush2.msra.mxu0 0.0
    %1428 = vmatprep.subr.mxu0 0.0
    %1429 = vmatpush2.msra.mxu0 0.0
    %1430 = vmatprep.mubr.f32.mxu0 0.0
    %1431 = vmatmul.mubr.f32.gmra.mxu0 %v1355
    %v1432 = vpop.f32.mrf.mxu0
    %v1433 = vadd.f32 %v1332, %v1432
    %v1434 = vpop.f32.mrf.mxu0
    %v1435 = vadd.f32 %v1334, %v1434
    %1436 = vmatprep.mubr.f32.mxu0 0.0
    %1437 = vmatmul.mubr.f32.gmra.mxu0 %v1358
    %v1438 = vpop.f32.mrf.mxu0
    %v1439 = vadd.f32 %v1338, %v1438
    %v1440 = vpop.f32.mrf.mxu0
    %v1441 = vadd.f32 %v1340, %v1440
    %1442 = vmatprep.mubr.f32.mxu0 0.0
    %1443 = vmatmul.mubr.f32.gmra.mxu0 %v1361
    %v1444 = vpop.f32.mrf.mxu0
    %v1445 = vadd.f32 %v1344, %v1444
    %v1446 = vpop.f32.mrf.mxu0
    %v1447 = vadd.f32 %v1346, %v1446
    %1448 = vmatprep.mubr.f32.mxu0 0.0
    %1449 = vmatmul.mubr.f32.gmra.mxu0 %v1364
    %v1450 = vpop.f32.mrf.mxu0
    %v1451 = vadd.f32 %v1350, %v1450
    %v1452 = vpop.f32.mrf.mxu0
    %v1453 = vadd.f32 %v1352, %v1452
    %1454 = vdwg.mxu0
    %v1455 = vmax.f32 %v1433, 0.0
    %v1456 = vmax.f32 %v1435, 0.0
    %v1457 = vmax.f32 %v1439, 0.0
    %v1458 = vmax.f32 %v1441, 0.0
    %v1459 = vmax.f32 %v1445, 0.0
    %v1460 = vmax.f32 %v1447, 0.0
    %v1461 = vmax.f32 %v1451, 0.0
    %v1462 = vmax.f32 %v1453, 0.0
    %vm1463 = vcmp.ge.f32.partialorder %v1433, 0.01
    %vm1464 = vcmp.ge.f32.partialorder %v1435, 0.01
    %vm1465 = vcmp.ge.f32.partialorder %v1439, 0.01
    %vm1466 = vcmp.ge.f32.partialorder %v1441, 0.01
    %vm1467 = vcmp.ge.f32.partialorder %v1445, 0.01
    %vm1468 = vcmp.ge.f32.partialorder %v1447, 0.01
    %vm1469 = vcmp.ge.f32.partialorder %v1451, 0.01
    %vm1470 = vcmp.ge.f32.partialorder %v1453, 0.01
    %v1471 = vmul.f32 %v1455, %v1455
    %v1472 = vmul.f32 %v1456, %v1456
    %v1473 = vmul.f32 %v1457, %v1457
    %v1474 = vmul.f32 %v1458, %v1458
    %v1475 = vmul.f32 %v1459, %v1459
    %v1476 = vmul.f32 %v1460, %v1460
    %v1477 = vmul.f32 %v1461, %v1461
    %v1478 = vmul.f32 %v1462, %v1462
    %v1479 = vmul.f32 %v1471, 50.0
    %v1480 = vmul.f32 %v1472, 50.0
    %v1481 = vmul.f32 %v1473, 50.0
    %v1482 = vmul.f32 %v1474, 50.0
    %v1483 = vmul.f32 %v1475, 50.0
    %v1484 = vmul.f32 %v1476, 50.0
    %v1485 = vmul.f32 %v1477, 50.0
    %v1486 = vmul.f32 %v1478, 50.0
    %v1487 = vsel %vm1463, %v1433, %v1479
    %v1488 = vsel %vm1464, %v1435, %v1480
    %v1489 = vsel %vm1465, %v1439, %v1481
    %v1490 = vsel %vm1466, %v1441, %v1482
    %v1491 = vsel %vm1467, %v1445, %v1483
    %v1492 = vsel %vm1468, %v1447, %v1484
    %v1493 = vsel %vm1469, %v1451, %v1485
    %v1494 = vsel %vm1470, %v1453, %v1486
    %v1495 = vld [vmem:[%s2 + $0x40] sm:$0xff]
    %v1496 = vld [vmem:[%s1 + $0x60] sm:$0xff]
    %v1498 = vsel %vm21, %v1496, 0
    %1500 = vmatprep.subr.mxu0 0.0
    %1501 = vmatpush1.msra.mxu0 0.0
    %1502 = vmatprep.subr.mxu0 0.0
    %1503 = vmatpush1.msra.mxu0 0.0
    %1504 = vmatprep.subr.mxu0 0.0
    %1505 = vmatpush1.msra.mxu0 0.0
    %1506 = vmatprep.subr.mxu0 0.0
    %1507 = vmatpush1.msra.mxu0 0.0
    %1508 = vmatprep.subr.mxu0 0.0
    %1509 = vmatpush1.msra.mxu0 0.0
    %1510 = vmatprep.subr.mxu0 0.0
    %1511 = vmatpush1.msra.mxu0 0.0
    %1512 = vmatprep.subr.mxu0 0.0
    %1513 = vmatpush1.msra.mxu0 0.0
    %1514 = vmatprep.subr.mxu0 0.0
    %1515 = vmatpush1.msra.mxu0 0.0
    %1516 = vmatprep.subr.mxu0 0.0
    %1517 = vmatpush1.msra.mxu0 0.0
    %1518 = vmatprep.subr.mxu0 0.0
    %1519 = vmatpush1.msra.mxu0 0.0
    %1520 = vmatprep.subr.mxu0 0.0
    %1521 = vmatpush1.msra.mxu0 0.0
    %1522 = vmatprep.subr.mxu0 0.0
    %1523 = vmatpush1.msra.mxu0 0.0
    %1524 = vmatprep.subr.mxu0 0.0
    %1525 = vmatpush1.msra.mxu0 0.0
    %1526 = vmatprep.subr.mxu0 0.0
    %1527 = vmatpush1.msra.mxu0 0.0
    %1528 = vmatprep.subr.mxu0 0.0
    %1529 = vmatpush1.msra.mxu0 0.0
    %1530 = vmatprep.subr.mxu0 %v849
    %1531 = vmatpush1.msra.mxu0 %v848
    %1532 = vmatprep.subr.mxu0 0.0
    %1533 = vmatpush2.msra.mxu0 0.0
    %1534 = vmatprep.subr.mxu0 0.0
    %1535 = vmatpush2.msra.mxu0 0.0
    %1536 = vmatprep.subr.mxu0 0.0
    %1537 = vmatpush2.msra.mxu0 0.0
    %1538 = vmatprep.subr.mxu0 0.0
    %1539 = vmatpush2.msra.mxu0 0.0
    %1540 = vmatprep.subr.mxu0 0.0
    %1541 = vmatpush2.msra.mxu0 0.0
    %1542 = vmatprep.subr.mxu0 0.0
    %1543 = vmatpush2.msra.mxu0 0.0
    %1544 = vmatprep.subr.mxu0 0.0
    %1545 = vmatpush2.msra.mxu0 0.0
    %1546 = vmatprep.subr.mxu0 0.0
    %1547 = vmatpush2.msra.mxu0 0.0
    %1548 = vmatprep.subr.mxu0 0.0
    %1549 = vmatpush2.msra.mxu0 0.0
    %1550 = vmatprep.subr.mxu0 0.0
    %1551 = vmatpush2.msra.mxu0 0.0
    %1552 = vmatprep.subr.mxu0 0.0
    %1553 = vmatpush2.msra.mxu0 0.0
    %1554 = vmatprep.subr.mxu0 0.0
    %1555 = vmatpush2.msra.mxu0 0.0
    %1556 = vmatprep.subr.mxu0 0.0
    %1557 = vmatpush2.msra.mxu0 0.0
    %1558 = vmatprep.subr.mxu0 0.0
    %1559 = vmatpush2.msra.mxu0 0.0
    %1560 = vmatprep.subr.mxu0 0.0
    %1561 = vmatpush2.msra.mxu0 0.0
    %1562 = vmatprep.subr.mxu0 0.0
    %1563 = vmatpush2.msra.mxu0 0.0
    %1564 = vmatprep.mubr.f32.mxu0 0.0
    %1565 = vmatmul.mubr.f32.gmra.mxu0 %v1498
    %v1566 = vpop.f32.mrf.mxu0
    %v1567 = vadd.f32 0.0, %v1566
    %v1568 = vpop.f32.mrf.mxu0
    %v1569 = vadd.f32 0.0, %v1568
    %1570 = vdwg.mxu0
    %v1572 = vsel %vm272, %v1495, 0
    %1574 = vmatprep.subr.mxu0 0.0
    %1575 = vmatpush1.msra.mxu0 0.0
    %1576 = vmatprep.subr.mxu0 0.0
    %1577 = vmatpush1.msra.mxu0 0.0
    %1578 = vmatprep.subr.mxu0 0.0
    %1579 = vmatpush1.msra.mxu0 0.0
    %1580 = vmatprep.subr.mxu0 0.0
    %1581 = vmatpush1.msra.mxu0 0.0
    %1582 = vmatprep.subr.mxu0 0.0
    %1583 = vmatpush1.msra.mxu0 0.0
    %1584 = vmatprep.subr.mxu0 0.0
    %1585 = vmatpush1.msra.mxu0 0.0
    %1586 = vmatprep.subr.mxu0 0.0
    %1587 = vmatpush1.msra.mxu0 0.0
    %1588 = vmatprep.subr.mxu0 0.0
    %1589 = vmatpush1.msra.mxu0 0.0
    %1590 = vmatprep.subr.mxu0 0.0
    %1591 = vmatpush1.msra.mxu0 0.0
    %1592 = vmatprep.subr.mxu0 0.0
    %1593 = vmatpush1.msra.mxu0 0.0
    %1594 = vmatprep.subr.mxu0 0.0
    %1595 = vmatpush1.msra.mxu0 0.0
    %1596 = vmatprep.subr.mxu0 0.0
    %1597 = vmatpush1.msra.mxu0 0.0
    %1598 = vmatprep.subr.mxu0 %v1494
    %1599 = vmatpush1.msra.mxu0 %v1493
    %1600 = vmatprep.subr.mxu0 %v1492
    %1601 = vmatpush1.msra.mxu0 %v1491
    %1602 = vmatprep.subr.mxu0 %v1490
    %1603 = vmatpush1.msra.mxu0 %v1489
    %1604 = vmatprep.subr.mxu0 %v1488
    %1605 = vmatpush1.msra.mxu0 %v1487
    %1606 = vmatprep.subr.mxu0 0.0
    %1607 = vmatpush2.msra.mxu0 0.0
    %1608 = vmatprep.subr.mxu0 0.0
    %1609 = vmatpush2.msra.mxu0 0.0
    %1610 = vmatprep.subr.mxu0 0.0
    %1611 = vmatpush2.msra.mxu0 0.0
    %1612 = vmatprep.subr.mxu0 0.0
    %1613 = vmatpush2.msra.mxu0 0.0
    %1614 = vmatprep.subr.mxu0 0.0
    %1615 = vmatpush2.msra.mxu0 0.0
    %1616 = vmatprep.subr.mxu0 0.0
    %1617 = vmatpush2.msra.mxu0 0.0
    %1618 = vmatprep.subr.mxu0 0.0
    %1619 = vmatpush2.msra.mxu0 0.0
    %1620 = vmatprep.subr.mxu0 0.0
    %1621 = vmatpush2.msra.mxu0 0.0
    %1622 = vmatprep.subr.mxu0 0.0
    %1623 = vmatpush2.msra.mxu0 0.0
    %1624 = vmatprep.subr.mxu0 0.0
    %1625 = vmatpush2.msra.mxu0 0.0
    %1626 = vmatprep.subr.mxu0 0.0
    %1627 = vmatpush2.msra.mxu0 0.0
    %1628 = vmatprep.subr.mxu0 0.0
    %1629 = vmatpush2.msra.mxu0 0.0
    %1630 = vmatprep.subr.mxu0 0.0
    %1631 = vmatpush2.msra.mxu0 0.0
    %1632 = vmatprep.subr.mxu0 0.0
    %1633 = vmatpush2.msra.mxu0 0.0
    %1634 = vmatprep.subr.mxu0 0.0
    %1635 = vmatpush2.msra.mxu0 0.0
    %1636 = vmatprep.subr.mxu0 0.0
    %1637 = vmatpush2.msra.mxu0 0.0
    %1638 = vmatprep.mubr.f32.mxu0 0.0
    %1639 = vmatmul.mubr.f32.gmra.mxu0 %v1572
    %v1640 = vpop.f32.mrf.mxu0
    %v1641 = vadd.f32 %v1567, %v1640
    %v1642 = vpop.f32.mrf.mxu0
    %v1643 = vadd.f32 %v1569, %v1642
    %1644 = vdwg.mxu0
    %v1645 = vmax.f32 %v1641, 0.0
    %v1646 = vmax.f32 %v1643, 0.0
    %vm1647 = vcmp.ge.f32.partialorder %v1641, 0.01
    %vm1648 = vcmp.ge.f32.partialorder %v1643, 0.01
    %v1649 = vmul.f32 %v1645, %v1645
    %v1650 = vmul.f32 %v1646, %v1646
    %v1651 = vmul.f32 %v1649, 50.0
    %v1652 = vmul.f32 %v1650, 50.0
    %v1653 = vsel %vm1647, %v1641, %v1651
    %v1654 = vsel %vm1648, %v1643, %v1652
    %v1657 = vcombine.low %v1653, %v1654
    %v1659 = vunpack.c.l.s4 1966171168
    %v1660 = vunpack.c.0.s8 %v1659
    %v1661 = vlaneseq
    %v1662 = vshrl.u32 %v1661, 7
    %v1663 = vsub.s32 %v1660, %v1662
    %v1664 = vrot.slane %v1657, %v1663
    %v1666 = vunpack.c.l.s4 1966171168
    %v1667 = vunpack.c.0.s8 %v1666
    %v1668 = vlaneseq
    %v1669 = vshrl.u32 %v1668, 7
    %v1670 = vsub.s32 %v1667, %v1669
    %v1671 = vrot.slane %v1664, %v1670
    %s1673 = scalar_lea.vmem [#allocation2], 2
    %1674 = vst.msk [vmem:[%s1673] sm:$0x3] %vm845, %v1671
    // Predicated region
    $region14: #{tpu_custom_call.1} parent=1 // pred_check
      _
    $region15: #{tpu_custom_call.1} parent=1 // pred_check_branch
      %1676 = sbr.rel (0) target = $region17
    $region16: #{tpu_custom_call.1} parent=1 // pred_region
      %s1678 = ssub.s32 64, 64
      %1679 = vsyncadd [#allocation3], %s1678
      %s1681 = sshll.u32 [#allocation2], 4
      %s1682 = int_to_ptr.vmem [resolvable:$true] %s1681
      %1684 = dma.vmem_to_hbm [thread:$0]  %s1682, 64, %s3, [#allocation3]
    $region17: #{tpu_custom_call.1} parent=1 // pred_fallthru
      _
    // Predicated region
    $region18: #{tpu_custom_call.1} parent=1 // pred_check
      _
    $region19: #{tpu_custom_call.1} parent=1 // pred_check_branch
      %1686 = sbr.rel (0) target = $region21
    $region20: #{tpu_custom_call.1} parent=1 // pred_region
      %1687 = dma.done [#allocation3], 64
    $region21: #{tpu_custom_call.1} parent=1 // pred_fallthru
      _
    %1688 = vsyncpa [#allocation3], 1

</llo_original>
